<compile_context>
chip_gen: v5e
topology: v5e:2x2
jax: 0.10.0
libtpu: 0.0.40
codegen_flags: <defaults>
</compile_context>

<pallas_src>
import math

import jax
import jax.numpy as jnp
from jax.experimental import pallas as pl
from jax.experimental.pallas import tpu as pltpu


# Scoped-VMEM cap: below v7x's 64 MiB physical VMEM, ample for the tile caps below;
# raise toward 96-110 MiB on v6e/v5e (128 MiB VMEM) if growing GEMM tiles further.
_VMEM_LIMIT = 48 * 1024 * 1024


# ----------------------------- helpers ------------------------------------ #

def _pick_tile(dim, cap, align):
    """Largest tile <= cap that divides dim, preferring `align`-multiples; full dim if it fits."""
    if dim <= cap:
        return dim
    for a in (align, 128, 8):
        if a > cap:
            continue
        t = (cap // a) * a
        while t >= a:
            if dim % t == 0:
                return t
            t -= a
    return dim  # fall back to the full (always-legal) extent


def _largest_divisor_leq(n, cap):
    for d in range(min(n, cap), 0, -1):
        if n % d == 0:
            return d
    return 1


def _rope_tables(seq_len, head_dim, base=10000.0):
    """GPT-NeoX / Falcon rotary tables, f32 (S, head_dim).

    Returns (cos, sin_signed) where sin_signed already carries the rotate_half sign
    (-1 on the first half), so in-kernel RoPE is just x*cos + roll(x, d/2)*sin_signed.
    """
    half = head_dim // 2
    inv_freq = 1.0 / (base ** (jnp.arange(0, half, dtype=jnp.float32) / half))
    t = jnp.arange(seq_len, dtype=jnp.float32)
    freqs = jnp.outer(t, inv_freq)                        # (S, d/2)
    emb = jnp.concatenate([freqs, freqs], axis=-1)        # (S, d)
    sign = jnp.concatenate([-jnp.ones((half,), jnp.float32),
                            jnp.ones((half,), jnp.float32)])
    return jnp.cos(emb), jnp.sin(emb) * sign


# ------------------------- tiled GEMM kernel -------------------------------- #

def _make_linear_kernel(activation, has_residual):
    """x @ W with bf16 operands, f32 VMEM accumulator, fused activation/residual epilogue."""

    def kernel(x_ref, w_ref, *refs):
        if has_residual:
            res_ref, o_ref, acc_ref = refs
        else:
            o_ref, acc_ref = refs

        @pl.when(pl.program_id(2) == 0)
        def _init():
            acc_ref[...] = jnp.zeros_like(acc_ref)

        acc_ref[...] += jnp.dot(x_ref[...], w_ref[...],
                                preferred_element_type=jnp.float32)

        @pl.when(pl.program_id(2) == pl.num_programs(2) - 1)
        def _finalize():
            y = acc_ref[...]
            if activation == "gelu":
                y = jax.nn.gelu(y, approximate=True)      # tanh approx -> EUP slot
            if has_residual:
                y = y + res_ref[...].astype(jnp.float32)
            o_ref[...] = y.astype(o_ref.dtype)

    return kernel


def linear(x, w, *, residual=None, activation=None, out_dtype=jnp.bfloat16,
           tm_cap=512, tn_cap=512, tk_cap=1024):
    """Tiled (M,K)@(K,N) GEMM. Operands cast to bf16; accumulation in f32."""
    M, K = x.shape
    K2, N = w.shape
    assert K == K2
    tm = _pick_tile(M, tm_cap, 8)
    tn = _pick_tile(N, tn_cap, 256)     # 256-aligned for the 2x256x256 MXU (v6e/v7x)
    tk = _pick_tile(K, tk_cap, 256)
    grid = (M // tm, N // tn, K // tk)

    in_specs = [
        pl.BlockSpec((tm, tk), lambda i, j, k: (i, k)),
        pl.BlockSpec((tk, tn), lambda i, j, k: (k, j)),
    ]
    args = [x.astype(jnp.bfloat16), w.astype(jnp.bfloat16)]
    if residual is not None:
        in_specs.append(pl.BlockSpec((tm, tn), lambda i, j, k: (i, j)))
        args.append(residual)

    return pl.pallas_call(
        _make_linear_kernel(activation, residual is not None),
        out_shape=jax.ShapeDtypeStruct((M, N), out_dtype),
        grid=grid,
        in_specs=in_specs,
        out_specs=pl.BlockSpec((tm, tn), lambda i, j, k: (i, j)),
        scratch_shapes=[pltpu.VMEM((tm, tn), jnp.float32)],
        compiler_params=pltpu.CompilerParams(
            dimension_semantics=("parallel", "parallel", "arbitrary"),
            vmem_limit_bytes=_VMEM_LIMIT),
    )(*args)


# ---------------------------- LayerNorm kernel ------------------------------ #

def _make_ln_kernel(eps):
    def kernel(x_ref, w_ref, b_ref, o_ref):
        x = x_ref[...].astype(jnp.float32)                # f32 elementwise math
        mu = jnp.mean(x, axis=-1, keepdims=True)
        var = jnp.mean(jnp.square(x - mu), axis=-1, keepdims=True)
        y = (x - mu) * jax.lax.rsqrt(var + eps)
        o_ref[...] = (y * w_ref[...] + b_ref[...]).astype(o_ref.dtype)
    return kernel


def layer_norm(x2d, w, b, *, out_dtype, eps=1e-5, row_tile_cap=256):
    M, D = x2d.shape
    tr = _pick_tile(M, row_tile_cap, 8)
    return pl.pallas_call(
        _make_ln_kernel(eps),
        out_shape=jax.ShapeDtypeStruct((M, D), out_dtype),
        grid=(M // tr,),
        in_specs=[
            pl.BlockSpec((tr, D), lambda i: (i, 0)),
            pl.BlockSpec((1, D), lambda i: (0, 0)),
            pl.BlockSpec((1, D), lambda i: (0, 0)),
        ],
        out_specs=pl.BlockSpec((tr, D), lambda i: (i, 0)),
        compiler_params=pltpu.CompilerParams(
            dimension_semantics=("parallel",),
            vmem_limit_bytes=_VMEM_LIMIT),
    )(x2d, w.reshape(1, D), b.reshape(1, D))


# --------------- RoPE + softmax-scale, hoisted out of attention ------------- #

def _make_rope_kernel(n_heads, head_dim, scale):
    half = head_dim // 2

    def kernel(qkv_ref, cos_ref, sin_ref, o_ref):
        cos = cos_ref[...]                                # (tr, d) f32
        sin = sin_ref[...]                                # (tr, d) f32, sign-folded
        # Rotate every Q head (fold in 1/sqrt(d)) and the single shared K head.
        for h in range(n_heads + 1):
            sl = slice(h * head_dim, (h + 1) * head_dim)
            x = qkv_ref[0, :, sl].astype(jnp.float32)
            r = x * cos + pltpu.roll(x, half, 1) * sin    # rotate_half via XLU roll
            if h < n_heads:
                r = r * scale                             # softmax scale folded into Q
            o_ref[0, :, sl] = r.astype(o_ref.dtype)
        # Shared V passes through unrotated.
        vs = slice((n_heads + 1) * head_dim, (n_heads + 2) * head_dim)
        o_ref[0, :, vs] = qkv_ref[0, :, vs]

    return kernel


def apply_rope_scale(qkv, cos, sin_signed, n_heads, head_dim, *, row_tile=256):
    """Rotate Q (scaled) and K once per layer so the attention loop has no RoPE work."""
    B, S, W = qkv.shape
    tr = _pick_tile(S, row_tile, 16)
    scale = 1.0 / math.sqrt(head_dim)
    return pl.pallas_call(
        _make_rope_kernel(n_heads, head_dim, scale),
        out_shape=jax.ShapeDtypeStruct((B, S, W), qkv.dtype),
        grid=(B, S // tr),
        in_specs=[
            pl.BlockSpec((1, tr, W), lambda b, si: (b, si, 0)),
            pl.BlockSpec((tr, head_dim), lambda b, si: (si, 0)),
            pl.BlockSpec((tr, head_dim), lambda b, si: (si, 0)),
        ],
        out_specs=pl.BlockSpec((1, tr, W), lambda b, si: (b, si, 0)),
        compiler_params=pltpu.CompilerParams(
            dimension_semantics=("parallel", "parallel"),
            vmem_limit_bytes=_VMEM_LIMIT),
    )(qkv, cos, sin_signed)


# ---------------- multi-query flash attention (causal, head-blocked) -------- #

def _make_mqa_kernel(tq, tk, head_dim, hblk):
    def kernel(q_ref, k_ref, v_ref, o_ref, m_sc, l_sc, acc_sc):
        qi = pl.program_id(2)
        ki = pl.program_id(3)

        @pl.when(ki == 0)
        def _init():
            m_sc[...] = jnp.full_like(m_sc, -jnp.inf)
            l_sc[...] = jnp.zeros_like(l_sc)
            acc_sc[...] = jnp.zeros_like(acc_sc)

        def flash_update(masked):
            k = k_ref[0].astype(jnp.bfloat16)             # (tk, d) shared K (MQA)
            v = v_ref[0].astype(jnp.bfloat16)             # (tk, d) shared V (MQA)
            if masked:                                    # diagonal block only
                rows = jax.lax.broadcasted_iota(jnp.int32, (tq, tk), 0)
                cols = jax.lax.broadcasted_iota(jnp.int32, (tq, tk), 1)
                mask = rows >= cols                       # tq == tk, qi == ki
            for hh in range(hblk):                        # unrolled head block
                q_h = q_ref[0, :, hh * head_dim:(hh + 1) * head_dim].astype(jnp.bfloat16)
                s = jax.lax.dot_general(
                    q_h, k, (((1,), (1,)), ((), ())),
                    preferred_element_type=jnp.float32)   # (tq, tk) f32, scale pre-folded
                if masked:
                    s = jnp.where(mask, s, jnp.float32(-1e30))
                m_prev = m_sc[hh]                         # (tq, 1)
                m_new = jnp.maximum(m_prev, s.max(axis=-1, keepdims=True))
                alpha = jnp.exp(m_prev - m_new)
                p = jnp.exp(s - m_new)
                l_sc[hh] = alpha * l_sc[hh] + p.sum(axis=-1, keepdims=True)
                acc_sc[hh] = alpha * acc_sc[hh] + jnp.dot(
                    p.astype(jnp.bfloat16), v, preferred_element_type=jnp.float32)
                m_sc[hh] = m_new

        # Interior (strictly below-diagonal) KV tiles: no mask work at all.
        @pl.when(ki < qi)
        def _interior():
            flash_update(masked=False)

        # Diagonal KV tile: apply the triangular causal mask.
        @pl.when(ki == qi)
        def _diag():
            flash_update(masked=True)

        # Above-diagonal steps (ki > qi) do nothing; their K/V index_map is clamped so
        # no DMA is issued for them either.

        @pl.when(ki == pl.num_programs(3) - 1)
        def _finalize():
            for hh in range(hblk):
                o_ref[0, :, hh * head_dim:(hh + 1) * head_dim] = (
                    acc_sc[hh] * pl.reciprocal(l_sc[hh], approx=True)
                ).astype(o_ref.dtype)

    return kernel


def mqa_flash_attention(qkv_rot, n_heads, head_dim, *, q_tile=256, hblk=None,
                        out_dtype=jnp.bfloat16):
    """Causal multi-query flash attention.

    qkv_rot: (B, S, (H+2)*d) -- RoPE'd / scaled Q heads [0..H-1], RoPE'd shared K [H],
    shared V [H+1].  hblk query heads are blocked per grid step so K/V is streamed
    n_heads/hblk times fewer; output written directly in (B, S, H*d) layout.
    """
    B, S, _ = qkv_rot.shape
    tq = _pick_tile(S, q_tile, 128)
    tk = tq
    if hblk is None:
        hblk = _largest_divisor_leq(n_heads, 8)
    assert n_heads % hblk == 0
    grid = (B, n_heads // hblk, S // tq, S // tk)

    # Clamp the KV block index to the causal range: above-diagonal steps re-use the
    # resident diagonal block (same index -> Pallas skips the DMA); compute is skipped
    # by the pl.when guard in the kernel.
    kv_row = lambda qi, ki: jnp.minimum(ki, qi)

    return pl.pallas_call(
        _make_mqa_kernel(tq, tk, head_dim, hblk),
        out_shape=jax.ShapeDtypeStruct((B, S, n_heads * head_dim), out_dtype),
        grid=grid,
        in_specs=[
            # hblk Q heads (contiguous columns) per step.
            pl.BlockSpec((1, tq, hblk * head_dim),
                         lambda b, hg, qi, ki: (b, qi, hg)),
            # shared K / V, causally clamped.
            pl.BlockSpec((1, tk, head_dim),
                         lambda b, hg, qi, ki: (b, kv_row(qi, ki), n_heads)),
            pl.BlockSpec((1, tk, head_dim),
                         lambda b, hg, qi, ki: (b, kv_row(qi, ki), n_heads + 1)),
        ],
        out_specs=pl.BlockSpec((1, tq, hblk * head_dim),
                               lambda b, hg, qi, ki: (b, qi, hg)),
        scratch_shapes=[
            pltpu.VMEM((hblk, tq, 1), jnp.float32),         # running max m
            pltpu.VMEM((hblk, tq, 1), jnp.float32),         # running denom l
            pltpu.VMEM((hblk, tq, head_dim), jnp.float32),  # output accumulator
        ],
        compiler_params=pltpu.CompilerParams(
            dimension_semantics=("parallel", "parallel", "parallel", "arbitrary"),
            vmem_limit_bytes=_VMEM_LIMIT),
    )(qkv_rot, qkv_rot, qkv_rot)


# ------------------------------ Falcon layer -------------------------------- #

def falcon_decoder_layer(h, params, n_heads, head_dim, cos, sin_signed, *,
                         attn_q_tile=256):
    """Falcon-7B style parallel block: out = h + Attn(LN(h)) + MLP(LN(h))."""
    B, S, D = h.shape
    h2 = h.reshape(B * S, D)                              # bf16 residual stream

    # Shared input LayerNorm (f32 math, bf16 output feeding the MXU).
    ln = layer_norm(h2, params["ln_w"], params["ln_b"], out_dtype=jnp.bfloat16)

    # Fused QKV projection (multi-query layout).
    qkv = linear(ln, params["w_qkv"])                                  # (B*S, (H+2)*d) bf16
    qkv = qkv.reshape(B, S, (n_heads + 2) * head_dim)

    # One-shot RoPE (Q scaled, K rotated) hoisted out of the attention loop.
    qkv_rot = apply_rope_scale(qkv, cos, sin_signed, n_heads, head_dim)

    # Causal MQA flash attention (head-blocked, causally-clamped KV DMA).
    ctx = mqa_flash_attention(qkv_rot, n_heads, head_dim,
                              q_tile=attn_q_tile)                      # (B, S, D) bf16

    # Attention out-projection with fused residual add (h + attn_out), bf16 stream.
    h_attn = linear(ctx.reshape(B * S, D), params["w_o"],
                    residual=h2, out_dtype=jnp.bfloat16)

    # Parallel MLP branch on the same LN output; GELU and residual fused in epilogues.
    up = linear(ln, params["w_up"], activation="gelu")                 # (B*S, F) bf16
    out = linear(up, params["w_down"], residual=h_attn, out_dtype=jnp.bfloat16)

    return out.reshape(B, S, D)


# ------------------------------ model -------------------------------------- #

def init_params(key, vocab_size, hidden, n_heads, head_dim, n_layers, ffn_dim):
    keys = jax.random.split(key, 1 + n_layers)
    wte = (jax.random.normal(keys[0], (vocab_size, hidden), jnp.float32) * 0.02
           ).astype(jnp.bfloat16)
    qkv_out = (n_heads + 2) * head_dim  # multi-query fused QKV width
    layers = []
    for i in range(n_layers):
        ks = jax.random.split(keys[1 + i], 4)
        layers.append(dict(
            ln_w=jnp.ones((hidden,), jnp.float32),
            ln_b=jnp.zeros((hidden,), jnp.float32),
            # Weights stored (in_features, out_features) and in bf16:
            # MXU operands + halved weight DMA / VMEM residency.
            w_qkv=(jax.random.normal(ks[0], (hidden, qkv_out), jnp.float32) * 0.02
                   ).astype(jnp.bfloat16),
            w_o=(jax.random.normal(ks[1], (hidden, hidden), jnp.float32) * 0.02
                 ).astype(jnp.bfloat16),
            w_up=(jax.random.normal(ks[2], (hidden, ffn_dim), jnp.float32) * 0.02
                  ).astype(jnp.bfloat16),
            w_down=(jax.random.normal(ks[3], (ffn_dim, hidden), jnp.float32) * 0.02
                    ).astype(jnp.bfloat16),
        ))
    ln_f = (jnp.ones((hidden,), jnp.float32), jnp.zeros((hidden,), jnp.float32))
    return wte, layers, ln_f


def falcon_model_forward(input_ids, wte, layers, ln_f, n_heads, head_dim, *,
                         attn_q_tile=256):
    B, S = input_ids.shape
    D = n_heads * head_dim
    # Word embedding gather -- plain-JAX glue; residual stream kept in bf16.
    h = jnp.take(wte, input_ids, axis=0)                  # (B, S, D) bf16
    cos, sin_signed = _rope_tables(S, head_dim)
    for layer_params in layers:
        h = falcon_decoder_layer(h, layer_params, n_heads, head_dim, cos, sin_signed,
                                 attn_q_tile=attn_q_tile)
    hf = layer_norm(h.reshape(B * S, D), ln_f[0], ln_f[1], out_dtype=jnp.float32)
    return hf.reshape(B, S, D)                            # "last_hidden_state"


# ------------------------------ main ---------------------------------------- #

if __name__ == "__main__":
    VOCAB = 128
    BATCH = 2
    SEQ = 256                           # 2x2 KV grid at tq=128: exercises the causal
                                        # clamp, online softmax, and diagonal masking
    N_HEADS = 4
    HEAD_DIM = 128                      # lane-aligned head_dim (multiple of 128)
    HIDDEN = N_HEADS * HEAD_DIM         # 512
    N_LAYERS = 2
    FFN = 4 * HIDDEN                    # 2048

    key = jax.random.PRNGKey(0)
    k_ids, k_params = jax.random.split(key)

    input_ids = jax.random.randint(k_ids, (BATCH, SEQ), 0, VOCAB, dtype=jnp.int32)
    wte, layers, ln_f = init_params(k_params, VOCAB, HIDDEN, N_HEADS, HEAD_DIM,
                                    N_LAYERS, FFN)

    out = falcon_model_forward(input_ids, wte, layers, ln_f, N_HEADS, HEAD_DIM,
                               attn_q_tile=128)
    out = jax.block_until_ready(out)

    assert out.shape == (BATCH, SEQ, HIDDEN)
    assert bool(jnp.all(jnp.isfinite(out)))
    print("KERNEL_OK")
</pallas_src>

<mosaic_0001>
module attributes {stable_mosaic.version = 11 : i64} {
  func.func @kernel(%arg0: i32, %arg1: memref<256x512xbf16, #tpu.memory_space<vmem>>, %arg2: memref<1x512xf32, #tpu.memory_space<vmem>>, %arg3: memref<1x512xf32, #tpu.memory_space<vmem>>, %arg4: memref<256x512xbf16, #tpu.memory_space<vmem>>) attributes {dimension_semantics = [#tpu.dimension_semantics<parallel>], iteration_bounds = array<i64: 2>, scalar_prefetch = 0 : i64, scratch_operands = 0 : i64, tpu.core_type = #tpu.core_type<tc>, window_params = [{transform_indices = @transform_0, window_bounds = array<i64: 256, 512>}, {pipeline_mode = #tpu.pipeline_mode<synchronous>, transform_indices = @transform_1, window_bounds = array<i64: 1, 512>}, {pipeline_mode = #tpu.pipeline_mode<synchronous>, transform_indices = @transform_2, window_bounds = array<i64: 1, 512>}, {transform_indices = @transform_3, window_bounds = array<i64: 256, 512>}]} {
    %c0 = arith.constant 0 : index
    %c0_0 = arith.constant 0 : index
    %0 = vector.load %arg1[%c0, %c0_0] : memref<256x512xbf16, #tpu.memory_space<vmem>>, vector<256x512xbf16>
    %1 = arith.extf %0 : vector<256x512xbf16> to vector<256x512xf32>
    %cst = arith.constant dense<0.000000e+00> : vector<256xf32>
    %2 = vector.multi_reduction <add>, %1, %cst [1] : vector<256x512xf32> to vector<256xf32>
    %3 = vector.shape_cast %2 : vector<256xf32> to vector<256x1xf32>
    %cst_1 = arith.constant 5.120000e+02 : f32
    %4 = vector.broadcast %cst_1 : f32 to vector<256x1xf32>
    %5 = arith.divf %3, %4 : vector<256x1xf32>
    %6 = vector.broadcast %5 : vector<256x1xf32> to vector<256x512xf32>
    %7 = arith.subf %1, %6 : vector<256x512xf32>
    %8 = arith.mulf %7, %7 : vector<256x512xf32>
    %cst_2 = arith.constant dense<0.000000e+00> : vector<256xf32>
    %9 = vector.multi_reduction <add>, %8, %cst_2 [1] : vector<256x512xf32> to vector<256xf32>
    %10 = vector.shape_cast %9 : vector<256xf32> to vector<256x1xf32>
    %cst_3 = arith.constant 5.120000e+02 : f32
    %11 = vector.broadcast %cst_3 : f32 to vector<256x1xf32>
    %12 = arith.divf %10, %11 : vector<256x1xf32>
    %13 = vector.broadcast %5 : vector<256x1xf32> to vector<256x512xf32>
    %14 = arith.subf %1, %13 : vector<256x512xf32>
    %cst_4 = arith.constant 9.99999974E-6 : f32
    %15 = vector.broadcast %cst_4 : f32 to vector<256x1xf32>
    %16 = arith.addf %12, %15 : vector<256x1xf32>
    %17 = math.rsqrt %16 : vector<256x1xf32>
    %18 = vector.broadcast %17 : vector<256x1xf32> to vector<256x512xf32>
    %19 = arith.mulf %14, %18 : vector<256x512xf32>
    %c0_5 = arith.constant 0 : index
    %c0_6 = arith.constant 0 : index
    %20 = vector.load %arg2[%c0_5, %c0_6] : memref<1x512xf32, #tpu.memory_space<vmem>>, vector<1x512xf32>
    %21 = vector.broadcast %20 : vector<1x512xf32> to vector<256x512xf32>
    %22 = arith.mulf %19, %21 : vector<256x512xf32>
    %c0_7 = arith.constant 0 : index
    %c0_8 = arith.constant 0 : index
    %23 = vector.load %arg3[%c0_7, %c0_8] : memref<1x512xf32, #tpu.memory_space<vmem>>, vector<1x512xf32>
    %24 = vector.broadcast %23 : vector<1x512xf32> to vector<256x512xf32>
    %25 = arith.addf %22, %24 : vector<256x512xf32>
    %26 = arith.truncf %25 : vector<256x512xf32> to vector<256x512xbf16>
    %c0_9 = arith.constant 0 : index
    %c0_10 = arith.constant 0 : index
    %27 = vector.load %arg4[%c0_9, %c0_10] : memref<256x512xbf16, #tpu.memory_space<vmem>>, vector<256x512xbf16>
    tpu.vector_store %arg4[%c0_9, %c0_10], %26 {strides = array<i32>} : memref<256x512xbf16, #tpu.memory_space<vmem>>, vector<256x512xbf16>,
    return
  }
  func.func @transform_0(%arg0: i32) -> (i32, i32) {
    %c0_i32 = arith.constant 0 : i32
    %c0_i32_0 = arith.constant 0 : i32
    return %arg0, %c0_i32 : i32, i32
  }
  func.func @transform_1(%arg0: i32) -> (i32, i32) {
    %c0_i32 = arith.constant 0 : i32
    %c0_i32_0 = arith.constant 0 : i32
    %c0_i32_1 = arith.constant 0 : i32
    return %c0_i32, %c0_i32_0 : i32, i32
  }
  func.func @transform_2(%arg0: i32) -> (i32, i32) {
    %c0_i32 = arith.constant 0 : i32
    %c0_i32_0 = arith.constant 0 : i32
    %c0_i32_1 = arith.constant 0 : i32
    return %c0_i32, %c0_i32_0 : i32, i32
  }
  func.func @transform_3(%arg0: i32) -> (i32, i32) {
    %c0_i32 = arith.constant 0 : i32
    %c0_i32_0 = arith.constant 0 : i32
    return %arg0, %c0_i32 : i32, i32
  }
}

</mosaic_0001>

<llo_original>
// kernel: tpu_custom_call.1
$region0: #{tpu_custom_call.1}
  #allocation0 [shape = 'u32[]', space=smem, size = 0x4, offset = 0x4, fixed_abs, tag = 'smem constant byte address 0x4 - core index']
  #allocation1 [shape = 'u32[72,128]{1,0:T(1,128)}', space=vmem, size = 0x9000, scoped, tag = 'internal scratch']
  %s0 = inlined_call_operand.hbm [shape: bf16[512,512], index: 0, kind: input, shape index: {}]
  %s1 = inlined_call_operand.hbm [shape: f32[1,512], index: 1, kind: input, shape index: {}]
  %s2 = inlined_call_operand.hbm [shape: f32[1,512], index: 2, kind: input, shape index: {}]
  %s3 = inlined_call_operand.hbm [shape: bf16[512,512], index: 3, kind: output, shape index: {}]
  %s4 = sld [smem:[#allocation0]]
  $region57: #{tpu_custom_call.1} parent=0
    _
  %s6 = ssub.s32 1, %s4
  %s7 = scalar_select 0, %s6, %s4
  $region1: #{tpu_custom_call.1} parent=0
    #allocation2 [shape = 'u8[524288]{0}', space=vmem, size = 0x80000, scoped, tag = 'input window, operand 0']
    #allocation3 [shape = 's32[2]{0}', space=sflag, size = 0x8, scoped, tag = 'scoped memory for tpu_custom_call.1']
    #allocation4 [shape = 's32[2]{0}', space=sflag, size = 0x8, scoped, tag = 'scoped memory for tpu_custom_call.1']
    #allocation5 [shape = 'u8[2048]{0}', space=vmem, size = 0x800, scoped, tag = 'input window, operand 1, single buffered']
    #allocation6 [shape = 's32[1]{0}', space=sflag, size = 0x4, scoped, tag = 'scoped memory for tpu_custom_call.1']
    #allocation7 [shape = 'u8[2048]{0}', space=vmem, size = 0x800, scoped, tag = 'input window, operand 2, single buffered']
    #allocation8 [shape = 'u8[524288]{0}', space=vmem, size = 0x80000, scoped, tag = 'output window, operand 0']
    %8 = vsyncpa [#allocation3], 0
    %s9 = scalar_lea.sflag [#allocation3], 1
    %10 = vsyncpa %s9, 0
    %11 = vsyncpa [#allocation6], 0
    %12 = vsyncpa [#allocation4], 0
    %s13 = scalar_lea.sflag [#allocation4], 1
    %14 = vsyncpa %s13, 0
    loop: start=0, step=1, limit=4
    $region2: #{tpu_custom_call.1} parent=1 // loop_pre_header
      _
    $region3: #{tpu_custom_call.1} parent=1 // loop_header
      %s16 = sphi 0, %s20
      %p17 = scmp.ge.s32.totalorder %s16, 4
      %s26 = sphi 0, %s28
      %s29 = sphi 0, %s26
      %s30 = sphi 0, %s29
      %s46 = sphi 0, %s30
      %s50 = sphi 0, %s50
      %s52 = sphi 0, %s50
      %s53 = sphi 0, %s52
      %s67 = sphi 0, %s53
      %s71 = sphi 0, %s71
      %s73 = sphi 0, %s71
      %s74 = sphi 0, %s73
      %s88 = sphi 0, %s74
      %s94 = sphi 0, %s96
      %s97 = sphi 0, %s94
      %s98 = sphi 0, %s97
      %s114 = sphi 0, %s98
    $region4: #{tpu_custom_call.1} parent=1 // loop_header_branch
      %19 = sbr.rel (%p17) target = $region8
    $region5: #{tpu_custom_call.1} parent=1 // loop_body
      %s21 = ssub.s32 %s16, 1
      %s22 = ssub.s32 %s16, 2
      %s23 = sadd.s32 %s16, 1
      %s24 = ssub.s32 %s16, %s23
      %p25 = scmp.eq.s32.totalorder %s24, 0
      %s27 = sadd.s32 %s26, 1
      %s28 = scalar_select %p25, %s26, %s27
      %p31 = pneg %p25
      %p32 = scmp.eq.s32.totalorder %s16, 1
      %p33 = por %p31, %p32
      %p34 = scmp.ne.s32.totalorder %s26, %s29
      %p35 = scmp.eq.s32.totalorder %s16, 0
      %p36 = por %p34, %p35
      %p37 = scmp.ne.s32.totalorder %s26, %s29
      %p38 = scmp.eq.s32.totalorder %s21, 1
      %p39 = por %p37, %p38
      %p40 = scmp.ne.s32.totalorder %s29, %s30
      %p41 = scmp.eq.s32.totalorder %s21, 0
      %p42 = por %p40, %p41
      %p43 = scmp.ne.s32.totalorder %s29, %s30
      %p44 = scmp.eq.s32.totalorder %s22, 1
      %p45 = por %p43, %p44
      %p47 = scmp.ne.s32.totalorder %s30, %s46
      %p48 = scmp.eq.s32.totalorder %s22, 0
      %p49 = por %p47, %p48
      %s51 = sadd.s32 %s50, 1
      %p54 = scmp.eq.s32.totalorder %s16, 1
      %p55 = scmp.ne.s32.totalorder %s50, %s52
      %p56 = scmp.eq.s32.totalorder %s16, 0
      %p57 = por %p55, %p56
      %p58 = scmp.ne.s32.totalorder %s50, %s52
      %p59 = scmp.eq.s32.totalorder %s21, 1
      %p60 = por %p58, %p59
      %p61 = scmp.ne.s32.totalorder %s52, %s53
      %p62 = scmp.eq.s32.totalorder %s21, 0
      %p63 = por %p61, %p62
      %p64 = scmp.ne.s32.totalorder %s52, %s53
      %p65 = scmp.eq.s32.totalorder %s22, 1
      %p66 = por %p64, %p65
      %p68 = scmp.ne.s32.totalorder %s53, %s67
      %p69 = scmp.eq.s32.totalorder %s22, 0
      %p70 = por %p68, %p69
      %s72 = sadd.s32 %s71, 1
      %p75 = scmp.eq.s32.totalorder %s16, 1
      %p76 = scmp.ne.s32.totalorder %s71, %s73
      %p77 = scmp.eq.s32.totalorder %s16, 0
      %p78 = por %p76, %p77
      %p79 = scmp.ne.s32.totalorder %s71, %s73
      %p80 = scmp.eq.s32.totalorder %s21, 1
      %p81 = por %p79, %p80
      %p82 = scmp.ne.s32.totalorder %s73, %s74
      %p83 = scmp.eq.s32.totalorder %s21, 0
      %p84 = por %p82, %p83
      %p85 = scmp.ne.s32.totalorder %s73, %s74
      %p86 = scmp.eq.s32.totalorder %s22, 1
      %p87 = por %p85, %p86
      %p89 = scmp.ne.s32.totalorder %s74, %s88
      %p90 = scmp.eq.s32.totalorder %s22, 0
      %p91 = por %p89, %p90
      %s92 = ssub.s32 %s16, %s23
      %p93 = scmp.eq.s32.totalorder %s92, 0
      %s95 = sadd.s32 %s94, 1
      %s96 = scalar_select %p93, %s94, %s95
      %p99 = pneg %p93
      %p100 = scmp.eq.s32.totalorder %s16, 1
      %p101 = por %p99, %p100
      %p102 = scmp.ne.s32.totalorder %s94, %s97
      %p103 = scmp.eq.s32.totalorder %s16, 0
      %p104 = por %p102, %p103
      %p105 = scmp.ne.s32.totalorder %s94, %s97
      %p106 = scmp.eq.s32.totalorder %s21, 1
      %p107 = por %p105, %p106
      %p108 = scmp.ne.s32.totalorder %s97, %s98
      %p109 = scmp.eq.s32.totalorder %s21, 0
      %p110 = por %p108, %p109
      %p111 = scmp.ne.s32.totalorder %s97, %s98
      %p112 = scmp.eq.s32.totalorder %s22, 1
      %p113 = por %p111, %p112
      %p115 = scmp.ne.s32.totalorder %s98, %s114
      %p116 = scmp.eq.s32.totalorder %s22, 0
      %p117 = por %p115, %p116
      %p118 = scmp.le.s32.totalorder 1, %s16
      %p119 = scmp.lt.s32.totalorder %s16, 3
      %p120 = pnand %p118, %p119
      %p121 = pneg %p120
      // Predicated region
      $region9: #{tpu_custom_call.1} parent=5 // pred_check
        _
      $region10: #{tpu_custom_call.1} parent=5 // pred_check_branch
        %123 = sbr.rel (%p120) target = $region12
      $region11: #{tpu_custom_call.1} parent=5 // pred_region
        %s124 = ssub.s32 %s16, 1
        // Predicated region
        $region13: #{tpu_custom_call.1} parent=11 // pred_check
          %p125 = pneg %p63
        $region14: #{tpu_custom_call.1} parent=11 // pred_check_branch
          %127 = sbr.rel (%p125) target = $region16
        $region15: #{tpu_custom_call.1} parent=11 // pred_region
          %129 = vsyncadd [#allocation6], 0
          %s131 = sshll.u32 %s1, 4
          %s132 = int_to_ptr.hbm [resolvable:$true] %s131
          %s133 = sshll.u32 [#allocation5], 4
          %s134 = int_to_ptr.vmem [resolvable:$true] %s133
          %136 = dma.hbm_to_vmem [thread:$0]  %s132, 64, %s134, [#allocation6]
        $region16: #{tpu_custom_call.1} parent=11 // pred_fallthru
          _
        // Predicated region
        $region17: #{tpu_custom_call.1} parent=11 // pred_check
          %p137 = pneg %p84
        $region18: #{tpu_custom_call.1} parent=11 // pred_check_branch
          %139 = sbr.rel (%p137) target = $region20
        $region19: #{tpu_custom_call.1} parent=11 // pred_region
          %141 = vsyncadd [#allocation6], 0
          %s143 = sshll.u32 %s2, 4
          %s144 = int_to_ptr.hbm [resolvable:$true] %s143
          %s145 = sshll.u32 [#allocation7], 4
          %s146 = int_to_ptr.vmem [resolvable:$true] %s145
          %148 = dma.hbm_to_vmem [thread:$0]  %s144, 64, %s146, [#allocation6]
        $region20: #{tpu_custom_call.1} parent=11 // pred_fallthru
          _
      $region12: #{tpu_custom_call.1} parent=5 // pred_fallthru
        _
      %p149 = scmp.lt.s32.totalorder %s16, 2
      // Predicated region
      $region21: #{tpu_custom_call.1} parent=5 // pred_check
        %p150 = pneg %p149
      $region22: #{tpu_custom_call.1} parent=5 // pred_check_branch
        %152 = sbr.rel (%p150) target = $region24
      $region23: #{tpu_custom_call.1} parent=5 // pred_region
        // Predicated region
        $region25: #{tpu_custom_call.1} parent=23 // pred_check
          %p153 = pneg %p36
        $region26: #{tpu_custom_call.1} parent=23 // pred_check_branch
          %155 = sbr.rel (%p153) target = $region28
        $region27: #{tpu_custom_call.1} parent=23 // pred_region
          %s156 = sand.u32 %s26, 1
          %s157 = scalar_lea.sflag [#allocation3], %s156
          %s158 = sand.u32 %s26, 1
          %s159 = smul.addr %s158, 512
          %s160 = scalar_lea.vmem [#allocation2], %s159
          %s161 = smul.u32 32, %s16
          %163 = vsyncadd %s157, 0
          %s164 = smul.addr %s161, 4
          %s165 = smul.addr %s164, 4
          %s166 = scalar_lea.hbm %s0, %s165
          %s167 = sshll.u32 %s166, 4
          %s168 = int_to_ptr.hbm [resolvable:$true] %s167
          %s169 = sshll.u32 %s160, 4
          %s170 = int_to_ptr.vmem [resolvable:$true] %s169
          %175 = dma.hbm_to_vmem [thread:$0]  %s168, 8192, %s170, %s157, 256, 256, 16
        $region28: #{tpu_custom_call.1} parent=23 // pred_fallthru
          _
      $region24: #{tpu_custom_call.1} parent=5 // pred_fallthru
        _
      %p176 = scmp.le.s32.totalorder 1, %s16
      %p177 = scmp.lt.s32.totalorder %s16, 3
      %p178 = pnand %p176, %p177
      %p179 = pneg %p178
      // Predicated region
      $region29: #{tpu_custom_call.1} parent=5 // pred_check
        _
      $region30: #{tpu_custom_call.1} parent=5 // pred_check_branch
        %181 = sbr.rel (%p178) target = $region32
      $region31: #{tpu_custom_call.1} parent=5 // pred_region
        %s182 = ssub.s32 %s16, 1
        %s183 = sand.u32 %s29, 1
        %s184 = scalar_lea.sflag [#allocation3], %s183
        %s185 = sand.u32 %s29, 1
        %s186 = smul.addr %s185, 512
        %s187 = scalar_lea.vmem [#allocation2], %s186
        // Predicated region
        $region33: #{tpu_custom_call.1} parent=31 // pred_check
          %p188 = pneg %p42
        $region34: #{tpu_custom_call.1} parent=31 // pred_check_branch
          %190 = sbr.rel (%p188) target = $region36
        $region35: #{tpu_custom_call.1} parent=31 // pred_region
          %192 = dma.done %s184, 8192
        $region36: #{tpu_custom_call.1} parent=31 // pred_fallthru
          _
        // Predicated region
        $region37: #{tpu_custom_call.1} parent=31 // pred_check
          %p193 = pneg %p63
        $region38: #{tpu_custom_call.1} parent=31 // pred_check_branch
          %195 = sbr.rel (%p193) target = $region40
        $region39: #{tpu_custom_call.1} parent=31 // pred_region
          %197 = dma.done [#allocation6], 64
        $region40: #{tpu_custom_call.1} parent=31 // pred_fallthru
          _
        // Predicated region
        $region41: #{tpu_custom_call.1} parent=31 // pred_check
          %p198 = pneg %p84
        $region42: #{tpu_custom_call.1} parent=31 // pred_check_branch
          %200 = sbr.rel (%p198) target = $region44
        $region43: #{tpu_custom_call.1} parent=31 // pred_region
          %202 = dma.done [#allocation6], 64
        $region44: #{tpu_custom_call.1} parent=31 // pred_fallthru
          _
        %s203 = sand.u32 %s29, 1
        %s204 = scalar_lea.sflag [#allocation3], %s203
        %s205 = sand.u32 %s29, 1
        %s206 = smul.addr %s205, 512
        %s207 = scalar_lea.vmem [#allocation2], %s206
        %p208 = pneg %p42
        %p209 = pneg %p39
        %p210 = pneg %p63
        %p211 = pneg %p60
        %p212 = pneg %p84
        %p213 = pneg %p81
        %p214 = pneg %p110
        %p215 = pneg %p107
        %s216 = sand.u32 %s97, 1
        %s217 = scalar_lea.sflag [#allocation4], %s216
        %s218 = sand.u32 %s97, 1
        %s219 = smul.addr %s218, 512
        %s220 = scalar_lea.vmem [#allocation8], %s219
        %s221 = smul.u32 32, %s21
        %s222 = smul.u32 32, %s21
        %v223 = vld [vmem:[%s187] sm:$0xff]
        %v224 = vld [vmem:[%s187 + $0x8] sm:$0xff]
        %v225 = vld [vmem:[%s187 + $0x10] sm:$0xff]
        %v226 = vld [vmem:[%s187 + $0x18] sm:$0xff]
        %v227 = vld [vmem:[%s187 + $0x20] sm:$0xff]
        %v228 = vld [vmem:[%s187 + $0x28] sm:$0xff]
        %v229 = vld [vmem:[%s187 + $0x30] sm:$0xff]
        %v230 = vld [vmem:[%s187 + $0x38] sm:$0xff]
        %v231 = vld [vmem:[%s187 + $0x40] sm:$0xff]
        %v232 = vld [vmem:[%s187 + $0x48] sm:$0xff]
        %v233 = vld [vmem:[%s187 + $0x50] sm:$0xff]
        %v234 = vld [vmem:[%s187 + $0x58] sm:$0xff]
        %v235 = vld [vmem:[%s187 + $0x60] sm:$0xff]
        %v236 = vld [vmem:[%s187 + $0x68] sm:$0xff]
        %v237 = vld [vmem:[%s187 + $0x70] sm:$0xff]
        %v238 = vld [vmem:[%s187 + $0x78] sm:$0xff]
        %v239 = vld [vmem:[%s187 + $0x80] sm:$0xff]
        %v240 = vld [vmem:[%s187 + $0x88] sm:$0xff]
        %v241 = vld [vmem:[%s187 + $0x90] sm:$0xff]
        %v242 = vld [vmem:[%s187 + $0x98] sm:$0xff]
        %v243 = vld [vmem:[%s187 + $0xa0] sm:$0xff]
        %v244 = vld [vmem:[%s187 + $0xa8] sm:$0xff]
        %v245 = vld [vmem:[%s187 + $0xb0] sm:$0xff]
        %v246 = vld [vmem:[%s187 + $0xb8] sm:$0xff]
        %v247 = vld [vmem:[%s187 + $0xc0] sm:$0xff]
        %v248 = vld [vmem:[%s187 + $0xc8] sm:$0xff]
        %v249 = vld [vmem:[%s187 + $0xd0] sm:$0xff]
        %v250 = vld [vmem:[%s187 + $0xd8] sm:$0xff]
        %v251 = vld [vmem:[%s187 + $0xe0] sm:$0xff]
        %v252 = vld [vmem:[%s187 + $0xe8] sm:$0xff]
        %v253 = vld [vmem:[%s187 + $0xf0] sm:$0xff]
        %v254 = vld [vmem:[%s187 + $0xf8] sm:$0xff]
        %v255 = vld [vmem:[%s187 + $0x100] sm:$0xff]
        %v256 = vld [vmem:[%s187 + $0x108] sm:$0xff]
        %v257 = vld [vmem:[%s187 + $0x110] sm:$0xff]
        %v258 = vld [vmem:[%s187 + $0x118] sm:$0xff]
        %v259 = vld [vmem:[%s187 + $0x120] sm:$0xff]
        %v260 = vld [vmem:[%s187 + $0x128] sm:$0xff]
        %v261 = vld [vmem:[%s187 + $0x130] sm:$0xff]
        %v262 = vld [vmem:[%s187 + $0x138] sm:$0xff]
        %v263 = vld [vmem:[%s187 + $0x140] sm:$0xff]
        %v264 = vld [vmem:[%s187 + $0x148] sm:$0xff]
        %v265 = vld [vmem:[%s187 + $0x150] sm:$0xff]
        %v266 = vld [vmem:[%s187 + $0x158] sm:$0xff]
        %v267 = vld [vmem:[%s187 + $0x160] sm:$0xff]
        %v268 = vld [vmem:[%s187 + $0x168] sm:$0xff]
        %v269 = vld [vmem:[%s187 + $0x170] sm:$0xff]
        %v270 = vld [vmem:[%s187 + $0x178] sm:$0xff]
        %v271 = vld [vmem:[%s187 + $0x180] sm:$0xff]
        %v272 = vld [vmem:[%s187 + $0x188] sm:$0xff]
        %v273 = vld [vmem:[%s187 + $0x190] sm:$0xff]
        %v274 = vld [vmem:[%s187 + $0x198] sm:$0xff]
        %v275 = vld [vmem:[%s187 + $0x1a0] sm:$0xff]
        %v276 = vld [vmem:[%s187 + $0x1a8] sm:$0xff]
        %v277 = vld [vmem:[%s187 + $0x1b0] sm:$0xff]
        %v278 = vld [vmem:[%s187 + $0x1b8] sm:$0xff]
        %v279 = vld [vmem:[%s187 + $0x1c0] sm:$0xff]
        %v280 = vld [vmem:[%s187 + $0x1c8] sm:$0xff]
        %v281 = vld [vmem:[%s187 + $0x1d0] sm:$0xff]
        %v282 = vld [vmem:[%s187 + $0x1d8] sm:$0xff]
        %v283 = vld [vmem:[%s187 + $0x1e0] sm:$0xff]
        %v284 = vld [vmem:[%s187 + $0x1e8] sm:$0xff]
        %v285 = vld [vmem:[%s187 + $0x1f0] sm:$0xff]
        %v286 = vld [vmem:[%s187 + $0x1f8] sm:$0xff]
        %v287 = vunpack.c.l.bf16 %v223
        %v288 = vunpack.c.h.bf16 %v223
        %v289 = vunpack.c.l.bf16 %v224
        %v290 = vunpack.c.h.bf16 %v224
        %v291 = vunpack.c.l.bf16 %v225
        %v292 = vunpack.c.h.bf16 %v225
        %v293 = vunpack.c.l.bf16 %v226
        %v294 = vunpack.c.h.bf16 %v226
        %v295 = vunpack.c.l.bf16 %v227
        %v296 = vunpack.c.h.bf16 %v227
        %v297 = vunpack.c.l.bf16 %v228
        %v298 = vunpack.c.h.bf16 %v228
        %v299 = vunpack.c.l.bf16 %v229
        %v300 = vunpack.c.h.bf16 %v229
        %v301 = vunpack.c.l.bf16 %v230
        %v302 = vunpack.c.h.bf16 %v230
        %v303 = vunpack.c.l.bf16 %v231
        %v304 = vunpack.c.h.bf16 %v231
        %v305 = vunpack.c.l.bf16 %v232
        %v306 = vunpack.c.h.bf16 %v232
        %v307 = vunpack.c.l.bf16 %v233
        %v308 = vunpack.c.h.bf16 %v233
        %v309 = vunpack.c.l.bf16 %v234
        %v310 = vunpack.c.h.bf16 %v234
        %v311 = vunpack.c.l.bf16 %v235
        %v312 = vunpack.c.h.bf16 %v235
        %v313 = vunpack.c.l.bf16 %v236
        %v314 = vunpack.c.h.bf16 %v236
        %v315 = vunpack.c.l.bf16 %v237
        %v316 = vunpack.c.h.bf16 %v237
        %v317 = vunpack.c.l.bf16 %v238
        %v318 = vunpack.c.h.bf16 %v238
        %v319 = vunpack.c.l.bf16 %v239
        %v320 = vunpack.c.h.bf16 %v239
        %v321 = vunpack.c.l.bf16 %v240
        %v322 = vunpack.c.h.bf16 %v240
        %v323 = vunpack.c.l.bf16 %v241
        %v324 = vunpack.c.h.bf16 %v241
        %v325 = vunpack.c.l.bf16 %v242
        %v326 = vunpack.c.h.bf16 %v242
        %v327 = vunpack.c.l.bf16 %v243
        %v328 = vunpack.c.h.bf16 %v243
        %v329 = vunpack.c.l.bf16 %v244
        %v330 = vunpack.c.h.bf16 %v244
        %v331 = vunpack.c.l.bf16 %v245
        %v332 = vunpack.c.h.bf16 %v245
        %v333 = vunpack.c.l.bf16 %v246
        %v334 = vunpack.c.h.bf16 %v246
        %v335 = vunpack.c.l.bf16 %v247
        %v336 = vunpack.c.h.bf16 %v247
        %v337 = vunpack.c.l.bf16 %v248
        %v338 = vunpack.c.h.bf16 %v248
        %v339 = vunpack.c.l.bf16 %v249
        %v340 = vunpack.c.h.bf16 %v249
        %v341 = vunpack.c.l.bf16 %v250
        %v342 = vunpack.c.h.bf16 %v250
        %v343 = vunpack.c.l.bf16 %v251
        %v344 = vunpack.c.h.bf16 %v251
        %v345 = vunpack.c.l.bf16 %v252
        %v346 = vunpack.c.h.bf16 %v252
        %v347 = vunpack.c.l.bf16 %v253
        %v348 = vunpack.c.h.bf16 %v253
        %v349 = vunpack.c.l.bf16 %v254
        %v350 = vunpack.c.h.bf16 %v254
        %v351 = vunpack.c.l.bf16 %v255
        %v352 = vunpack.c.h.bf16 %v255
        %v353 = vunpack.c.l.bf16 %v256
        %v354 = vunpack.c.h.bf16 %v256
        %v355 = vunpack.c.l.bf16 %v257
        %v356 = vunpack.c.h.bf16 %v257
        %v357 = vunpack.c.l.bf16 %v258
        %v358 = vunpack.c.h.bf16 %v258
        %v359 = vunpack.c.l.bf16 %v259
        %v360 = vunpack.c.h.bf16 %v259
        %v361 = vunpack.c.l.bf16 %v260
        %v362 = vunpack.c.h.bf16 %v260
        %v363 = vunpack.c.l.bf16 %v261
        %v364 = vunpack.c.h.bf16 %v261
        %v365 = vunpack.c.l.bf16 %v262
        %v366 = vunpack.c.h.bf16 %v262
        %v367 = vunpack.c.l.bf16 %v263
        %v368 = vunpack.c.h.bf16 %v263
        %v369 = vunpack.c.l.bf16 %v264
        %v370 = vunpack.c.h.bf16 %v264
        %v371 = vunpack.c.l.bf16 %v265
        %v372 = vunpack.c.h.bf16 %v265
        %v373 = vunpack.c.l.bf16 %v266
        %v374 = vunpack.c.h.bf16 %v266
        %v375 = vunpack.c.l.bf16 %v267
        %v376 = vunpack.c.h.bf16 %v267
        %v377 = vunpack.c.l.bf16 %v268
        %v378 = vunpack.c.h.bf16 %v268
        %v379 = vunpack.c.l.bf16 %v269
        %v380 = vunpack.c.h.bf16 %v269
        %v381 = vunpack.c.l.bf16 %v270
        %v382 = vunpack.c.h.bf16 %v270
        %v383 = vunpack.c.l.bf16 %v271
        %v384 = vunpack.c.h.bf16 %v271
        %v385 = vunpack.c.l.bf16 %v272
        %v386 = vunpack.c.h.bf16 %v272
        %v387 = vunpack.c.l.bf16 %v273
        %v388 = vunpack.c.h.bf16 %v273
        %v389 = vunpack.c.l.bf16 %v274
        %v390 = vunpack.c.h.bf16 %v274
        %v391 = vunpack.c.l.bf16 %v275
        %v392 = vunpack.c.h.bf16 %v275
        %v393 = vunpack.c.l.bf16 %v276
        %v394 = vunpack.c.h.bf16 %v276
        %v395 = vunpack.c.l.bf16 %v277
        %v396 = vunpack.c.h.bf16 %v277
        %v397 = vunpack.c.l.bf16 %v278
        %v398 = vunpack.c.h.bf16 %v278
        %v399 = vunpack.c.l.bf16 %v279
        %v400 = vunpack.c.h.bf16 %v279
        %v401 = vunpack.c.l.bf16 %v280
        %v402 = vunpack.c.h.bf16 %v280
        %v403 = vunpack.c.l.bf16 %v281
        %v404 = vunpack.c.h.bf16 %v281
        %v405 = vunpack.c.l.bf16 %v282
        %v406 = vunpack.c.h.bf16 %v282
        %v407 = vunpack.c.l.bf16 %v283
        %v408 = vunpack.c.h.bf16 %v283
        %v409 = vunpack.c.l.bf16 %v284
        %v410 = vunpack.c.h.bf16 %v284
        %v411 = vunpack.c.l.bf16 %v285
        %v412 = vunpack.c.h.bf16 %v285
        %v413 = vunpack.c.l.bf16 %v286
        %v414 = vunpack.c.h.bf16 %v286
        %v415 = vadd.f32 %v287, %v288
        %v416 = vadd.f32 %v415, %v289
        %v417 = vadd.f32 %v416, %v290
        %418 = vadd.xlane.f32.xlu0 %v417
        %v419 = vpop.xlane.xlu0 %418
        %v420 = vadd.f32 %v291, %v292
        %v421 = vadd.f32 %v420, %v293
        %v422 = vadd.f32 %v421, %v294
        %423 = vadd.xlane.f32.xlu0 %v422
        %v424 = vpop.xlane.xlu0 %423
        %v425 = vadd.f32 %v295, %v296
        %v426 = vadd.f32 %v425, %v297
        %v427 = vadd.f32 %v426, %v298
        %428 = vadd.xlane.f32.xlu0 %v427
        %v429 = vpop.xlane.xlu0 %428
        %v430 = vadd.f32 %v299, %v300
        %v431 = vadd.f32 %v430, %v301
        %v432 = vadd.f32 %v431, %v302
        %433 = vadd.xlane.f32.xlu0 %v432
        %v434 = vpop.xlane.xlu0 %433
        %v435 = vadd.f32 %v303, %v304
        %v436 = vadd.f32 %v435, %v305
        %v437 = vadd.f32 %v436, %v306
        %438 = vadd.xlane.f32.xlu0 %v437
        %v439 = vpop.xlane.xlu0 %438
        %v440 = vadd.f32 %v307, %v308
        %v441 = vadd.f32 %v440, %v309
        %v442 = vadd.f32 %v441, %v310
        %443 = vadd.xlane.f32.xlu0 %v442
        %v444 = vpop.xlane.xlu0 %443
        %v445 = vadd.f32 %v311, %v312
        %v446 = vadd.f32 %v445, %v313
        %v447 = vadd.f32 %v446, %v314
        %448 = vadd.xlane.f32.xlu0 %v447
        %v449 = vpop.xlane.xlu0 %448
        %v450 = vadd.f32 %v315, %v316
        %v451 = vadd.f32 %v450, %v317
        %v452 = vadd.f32 %v451, %v318
        %453 = vadd.xlane.f32.xlu0 %v452
        %v454 = vpop.xlane.xlu0 %453
        %v455 = vadd.f32 %v319, %v320
        %v456 = vadd.f32 %v455, %v321
        %v457 = vadd.f32 %v456, %v322
        %458 = vadd.xlane.f32.xlu0 %v457
        %v459 = vpop.xlane.xlu0 %458
        %v460 = vadd.f32 %v323, %v324
        %v461 = vadd.f32 %v460, %v325
        %v462 = vadd.f32 %v461, %v326
        %463 = vadd.xlane.f32.xlu0 %v462
        %v464 = vpop.xlane.xlu0 %463
        %v465 = vadd.f32 %v327, %v328
        %v466 = vadd.f32 %v465, %v329
        %v467 = vadd.f32 %v466, %v330
        %468 = vadd.xlane.f32.xlu0 %v467
        %v469 = vpop.xlane.xlu0 %468
        %v470 = vadd.f32 %v331, %v332
        %v471 = vadd.f32 %v470, %v333
        %v472 = vadd.f32 %v471, %v334
        %473 = vadd.xlane.f32.xlu0 %v472
        %v474 = vpop.xlane.xlu0 %473
        %v475 = vadd.f32 %v335, %v336
        %v476 = vadd.f32 %v475, %v337
        %v477 = vadd.f32 %v476, %v338
        %478 = vadd.xlane.f32.xlu0 %v477
        %v479 = vpop.xlane.xlu0 %478
        %v480 = vadd.f32 %v339, %v340
        %v481 = vadd.f32 %v480, %v341
        %v482 = vadd.f32 %v481, %v342
        %483 = vadd.xlane.f32.xlu0 %v482
        %v484 = vpop.xlane.xlu0 %483
        %v485 = vadd.f32 %v343, %v344
        %v486 = vadd.f32 %v485, %v345
        %v487 = vadd.f32 %v486, %v346
        %488 = vadd.xlane.f32.xlu0 %v487
        %v489 = vpop.xlane.xlu0 %488
        %v490 = vadd.f32 %v347, %v348
        %v491 = vadd.f32 %v490, %v349
        %v492 = vadd.f32 %v491, %v350
        %493 = vadd.xlane.f32.xlu0 %v492
        %v494 = vpop.xlane.xlu0 %493
        %v495 = vadd.f32 %v351, %v352
        %v496 = vadd.f32 %v495, %v353
        %v497 = vadd.f32 %v496, %v354
        %498 = vadd.xlane.f32.xlu0 %v497
        %v499 = vpop.xlane.xlu0 %498
        %v500 = vadd.f32 %v355, %v356
        %v501 = vadd.f32 %v500, %v357
        %v502 = vadd.f32 %v501, %v358
        %503 = vadd.xlane.f32.xlu0 %v502
        %v504 = vpop.xlane.xlu0 %503
        %v505 = vadd.f32 %v359, %v360
        %v506 = vadd.f32 %v505, %v361
        %v507 = vadd.f32 %v506, %v362
        %508 = vadd.xlane.f32.xlu0 %v507
        %v509 = vpop.xlane.xlu0 %508
        %v510 = vadd.f32 %v363, %v364
        %v511 = vadd.f32 %v510, %v365
        %v512 = vadd.f32 %v511, %v366
        %513 = vadd.xlane.f32.xlu0 %v512
        %v514 = vpop.xlane.xlu0 %513
        %v515 = vadd.f32 %v367, %v368
        %v516 = vadd.f32 %v515, %v369
        %v517 = vadd.f32 %v516, %v370
        %518 = vadd.xlane.f32.xlu0 %v517
        %v519 = vpop.xlane.xlu0 %518
        %v520 = vadd.f32 %v371, %v372
        %v521 = vadd.f32 %v520, %v373
        %v522 = vadd.f32 %v521, %v374
        %523 = vadd.xlane.f32.xlu0 %v522
        %v524 = vpop.xlane.xlu0 %523
        %v525 = vadd.f32 %v375, %v376
        %v526 = vadd.f32 %v525, %v377
        %v527 = vadd.f32 %v526, %v378
        %528 = vadd.xlane.f32.xlu0 %v527
        %v529 = vpop.xlane.xlu0 %528
        %v530 = vadd.f32 %v379, %v380
        %v531 = vadd.f32 %v530, %v381
        %v532 = vadd.f32 %v531, %v382
        %533 = vadd.xlane.f32.xlu0 %v532
        %v534 = vpop.xlane.xlu0 %533
        %v535 = vadd.f32 %v383, %v384
        %v536 = vadd.f32 %v535, %v385
        %v537 = vadd.f32 %v536, %v386
        %538 = vadd.xlane.f32.xlu0 %v537
        %v539 = vpop.xlane.xlu0 %538
        %v540 = vadd.f32 %v387, %v388
        %v541 = vadd.f32 %v540, %v389
        %v542 = vadd.f32 %v541, %v390
        %543 = vadd.xlane.f32.xlu0 %v542
        %v544 = vpop.xlane.xlu0 %543
        %v545 = vadd.f32 %v391, %v392
        %v546 = vadd.f32 %v545, %v393
        %v547 = vadd.f32 %v546, %v394
        %548 = vadd.xlane.f32.xlu0 %v547
        %v549 = vpop.xlane.xlu0 %548
        %v550 = vadd.f32 %v395, %v396
        %v551 = vadd.f32 %v550, %v397
        %v552 = vadd.f32 %v551, %v398
        %553 = vadd.xlane.f32.xlu0 %v552
        %v554 = vpop.xlane.xlu0 %553
        %v555 = vadd.f32 %v399, %v400
        %v556 = vadd.f32 %v555, %v401
        %v557 = vadd.f32 %v556, %v402
        %558 = vadd.xlane.f32.xlu0 %v557
        %v559 = vpop.xlane.xlu0 %558
        %v560 = vadd.f32 %v403, %v404
        %v561 = vadd.f32 %v560, %v405
        %v562 = vadd.f32 %v561, %v406
        %563 = vadd.xlane.f32.xlu0 %v562
        %v564 = vpop.xlane.xlu0 %563
        %v565 = vadd.f32 %v407, %v408
        %v566 = vadd.f32 %v565, %v409
        %v567 = vadd.f32 %v566, %v410
        %568 = vadd.xlane.f32.xlu0 %v567
        %v569 = vpop.xlane.xlu0 %568
        %v570 = vadd.f32 %v411, %v412
        %v571 = vadd.f32 %v570, %v413
        %v572 = vadd.f32 %v571, %v414
        %573 = vadd.xlane.f32.xlu0 %v572
        %v574 = vpop.xlane.xlu0 %573
        %v575 = vrcp.pop 512.0
        %v576 = vmul.f32 512.0, %v575
        %v577 = vsub.f32 1.0, %v576
        %v578 = vmul.f32 %v575, %v577
        %v579 = vadd.f32 %v575, %v578
        %vm580 = vweird.f32 %v575
        %v581 = vsel %vm580, %v575, %v579
        %v582 = vmul.f32 %v419, %v581
        %v583 = vmul.f32 %v424, %v581
        %v584 = vmul.f32 %v429, %v581
        %v585 = vmul.f32 %v434, %v581
        %v586 = vmul.f32 %v439, %v581
        %v587 = vmul.f32 %v444, %v581
        %v588 = vmul.f32 %v449, %v581
        %v589 = vmul.f32 %v454, %v581
        %v590 = vmul.f32 %v459, %v581
        %v591 = vmul.f32 %v464, %v581
        %v592 = vmul.f32 %v469, %v581
        %v593 = vmul.f32 %v474, %v581
        %v594 = vmul.f32 %v479, %v581
        %v595 = vmul.f32 %v484, %v581
        %v596 = vmul.f32 %v489, %v581
        %v597 = vmul.f32 %v494, %v581
        %v598 = vmul.f32 %v499, %v581
        %v599 = vmul.f32 %v504, %v581
        %v600 = vmul.f32 %v509, %v581
        %v601 = vmul.f32 %v514, %v581
        %v602 = vmul.f32 %v519, %v581
        %v603 = vmul.f32 %v524, %v581
        %v604 = vmul.f32 %v529, %v581
        %v605 = vmul.f32 %v534, %v581
        %v606 = vmul.f32 %v539, %v581
        %v607 = vmul.f32 %v544, %v581
        %v608 = vmul.f32 %v549, %v581
        %v609 = vmul.f32 %v554, %v581
        %v610 = vmul.f32 %v559, %v581
        %v611 = vmul.f32 %v564, %v581
        %v612 = vmul.f32 %v569, %v581
        %v613 = vmul.f32 %v574, %v581
        %v614 = vsub.f32 %v287, %v582
        %v615 = vsub.f32 %v288, %v582
        %v616 = vsub.f32 %v289, %v582
        %v617 = vsub.f32 %v290, %v582
        %v618 = vsub.f32 %v291, %v583
        %v619 = vsub.f32 %v292, %v583
        %v620 = vsub.f32 %v293, %v583
        %v621 = vsub.f32 %v294, %v583
        %v622 = vsub.f32 %v295, %v584
        %v623 = vsub.f32 %v296, %v584
        %v624 = vsub.f32 %v297, %v584
        %v625 = vsub.f32 %v298, %v584
        %v626 = vsub.f32 %v299, %v585
        %v627 = vsub.f32 %v300, %v585
        %v628 = vsub.f32 %v301, %v585
        %v629 = vsub.f32 %v302, %v585
        %v630 = vsub.f32 %v303, %v586
        %v631 = vsub.f32 %v304, %v586
        %v632 = vsub.f32 %v305, %v586
        %v633 = vsub.f32 %v306, %v586
        %v634 = vsub.f32 %v307, %v587
        %v635 = vsub.f32 %v308, %v587
        %v636 = vsub.f32 %v309, %v587
        %v637 = vsub.f32 %v310, %v587
        %v638 = vsub.f32 %v311, %v588
        %v639 = vsub.f32 %v312, %v588
        %v640 = vsub.f32 %v313, %v588
        %v641 = vsub.f32 %v314, %v588
        %v642 = vsub.f32 %v315, %v589
        %v643 = vsub.f32 %v316, %v589
        %v644 = vsub.f32 %v317, %v589
        %v645 = vsub.f32 %v318, %v589
        %v646 = vsub.f32 %v319, %v590
        %v647 = vsub.f32 %v320, %v590
        %v648 = vsub.f32 %v321, %v590
        %v649 = vsub.f32 %v322, %v590
        %v650 = vsub.f32 %v323, %v591
        %v651 = vsub.f32 %v324, %v591
        %v652 = vsub.f32 %v325, %v591
        %v653 = vsub.f32 %v326, %v591
        %v654 = vsub.f32 %v327, %v592
        %v655 = vsub.f32 %v328, %v592
        %v656 = vsub.f32 %v329, %v592
        %v657 = vsub.f32 %v330, %v592
        %v658 = vsub.f32 %v331, %v593
        %v659 = vsub.f32 %v332, %v593
        %v660 = vsub.f32 %v333, %v593
        %v661 = vsub.f32 %v334, %v593
        %v662 = vsub.f32 %v335, %v594
        %v663 = vsub.f32 %v336, %v594
        %v664 = vsub.f32 %v337, %v594
        %v665 = vsub.f32 %v338, %v594
        %v666 = vsub.f32 %v339, %v595
        %v667 = vsub.f32 %v340, %v595
        %v668 = vsub.f32 %v341, %v595
        %v669 = vsub.f32 %v342, %v595
        %v670 = vsub.f32 %v343, %v596
        %v671 = vsub.f32 %v344, %v596
        %v672 = vsub.f32 %v345, %v596
        %v673 = vsub.f32 %v346, %v596
        %v674 = vsub.f32 %v347, %v597
        %v675 = vsub.f32 %v348, %v597
        %v676 = vsub.f32 %v349, %v597
        %v677 = vsub.f32 %v350, %v597
        %v678 = vsub.f32 %v351, %v598
        %v679 = vsub.f32 %v352, %v598
        %v680 = vsub.f32 %v353, %v598
        %v681 = vsub.f32 %v354, %v598
        %v682 = vsub.f32 %v355, %v599
        %v683 = vsub.f32 %v356, %v599
        %v684 = vsub.f32 %v357, %v599
        %v685 = vsub.f32 %v358, %v599
        %v686 = vsub.f32 %v359, %v600
        %v687 = vsub.f32 %v360, %v600
        %v688 = vsub.f32 %v361, %v600
        %v689 = vsub.f32 %v362, %v600
        %v690 = vsub.f32 %v363, %v601
        %v691 = vsub.f32 %v364, %v601
        %v692 = vsub.f32 %v365, %v601
        %v693 = vsub.f32 %v366, %v601
        %v694 = vsub.f32 %v367, %v602
        %v695 = vsub.f32 %v368, %v602
        %v696 = vsub.f32 %v369, %v602
        %v697 = vsub.f32 %v370, %v602
        %v698 = vsub.f32 %v371, %v603
        %v699 = vsub.f32 %v372, %v603
        %v700 = vsub.f32 %v373, %v603
        %v701 = vsub.f32 %v374, %v603
        %v702 = vsub.f32 %v375, %v604
        %v703 = vsub.f32 %v376, %v604
        %v704 = vsub.f32 %v377, %v604
        %v705 = vsub.f32 %v378, %v604
        %v706 = vsub.f32 %v379, %v605
        %v707 = vsub.f32 %v380, %v605
        %v708 = vsub.f32 %v381, %v605
        %v709 = vsub.f32 %v382, %v605
        %v710 = vsub.f32 %v383, %v606
        %v711 = vsub.f32 %v384, %v606
        %v712 = vsub.f32 %v385, %v606
        %v713 = vsub.f32 %v386, %v606
        %v714 = vsub.f32 %v387, %v607
        %v715 = vsub.f32 %v388, %v607
        %v716 = vsub.f32 %v389, %v607
        %v717 = vsub.f32 %v390, %v607
        %v718 = vsub.f32 %v391, %v608
        %v719 = vsub.f32 %v392, %v608
        %v720 = vsub.f32 %v393, %v608
        %v721 = vsub.f32 %v394, %v608
        %v722 = vsub.f32 %v395, %v609
        %v723 = vsub.f32 %v396, %v609
        %v724 = vsub.f32 %v397, %v609
        %v725 = vsub.f32 %v398, %v609
        %v726 = vsub.f32 %v399, %v610
        %v727 = vsub.f32 %v400, %v610
        %v728 = vsub.f32 %v401, %v610
        %v729 = vsub.f32 %v402, %v610
        %v730 = vsub.f32 %v403, %v611
        %v731 = vsub.f32 %v404, %v611
        %v732 = vsub.f32 %v405, %v611
        %v733 = vsub.f32 %v406, %v611
        %v734 = vsub.f32 %v407, %v612
        %v735 = vsub.f32 %v408, %v612
        %v736 = vsub.f32 %v409, %v612
        %v737 = vsub.f32 %v410, %v612
        %v738 = vsub.f32 %v411, %v613
        %v739 = vsub.f32 %v412, %v613
        %v740 = vsub.f32 %v413, %v613
        %v741 = vsub.f32 %v414, %v613
        %v742 = vmul.f32 %v614, %v614
        %v743 = vmul.f32 %v615, %v615
        %v744 = vmul.f32 %v616, %v616
        %v745 = vmul.f32 %v617, %v617
        %v746 = vmul.f32 %v618, %v618
        %v747 = vmul.f32 %v619, %v619
        %v748 = vmul.f32 %v620, %v620
        %v749 = vmul.f32 %v621, %v621
        %v750 = vmul.f32 %v622, %v622
        %v751 = vmul.f32 %v623, %v623
        %v752 = vmul.f32 %v624, %v624
        %v753 = vmul.f32 %v625, %v625
        %v754 = vmul.f32 %v626, %v626
        %v755 = vmul.f32 %v627, %v627
        %v756 = vmul.f32 %v628, %v628
        %v757 = vmul.f32 %v629, %v629
        %v758 = vmul.f32 %v630, %v630
        %v759 = vmul.f32 %v631, %v631
        %v760 = vmul.f32 %v632, %v632
        %v761 = vmul.f32 %v633, %v633
        %v762 = vmul.f32 %v634, %v634
        %v763 = vmul.f32 %v635, %v635
        %v764 = vmul.f32 %v636, %v636
        %v765 = vmul.f32 %v637, %v637
        %v766 = vmul.f32 %v638, %v638
        %v767 = vmul.f32 %v639, %v639
        %v768 = vmul.f32 %v640, %v640
        %v769 = vmul.f32 %v641, %v641
        %v770 = vmul.f32 %v642, %v642
        %v771 = vmul.f32 %v643, %v643
        %v772 = vmul.f32 %v644, %v644
        %v773 = vmul.f32 %v645, %v645
        %v774 = vmul.f32 %v646, %v646
        %v775 = vmul.f32 %v647, %v647
        %v776 = vmul.f32 %v648, %v648
        %v777 = vmul.f32 %v649, %v649
        %v778 = vmul.f32 %v650, %v650
        %v779 = vmul.f32 %v651, %v651
        %v780 = vmul.f32 %v652, %v652
        %v781 = vmul.f32 %v653, %v653
        %v782 = vmul.f32 %v654, %v654
        %v783 = vmul.f32 %v655, %v655
        %v784 = vmul.f32 %v656, %v656
        %v785 = vmul.f32 %v657, %v657
        %v786 = vmul.f32 %v658, %v658
        %v787 = vmul.f32 %v659, %v659
        %v788 = vmul.f32 %v660, %v660
        %v789 = vmul.f32 %v661, %v661
        %v790 = vmul.f32 %v662, %v662
        %v791 = vmul.f32 %v663, %v663
        %v792 = vmul.f32 %v664, %v664
        %v793 = vmul.f32 %v665, %v665
        %v794 = vmul.f32 %v666, %v666
        %v795 = vmul.f32 %v667, %v667
        %v796 = vmul.f32 %v668, %v668
        %v797 = vmul.f32 %v669, %v669
        %v798 = vmul.f32 %v670, %v670
        %v799 = vmul.f32 %v671, %v671
        %v800 = vmul.f32 %v672, %v672
        %v801 = vmul.f32 %v673, %v673
        %v802 = vmul.f32 %v674, %v674
        %v803 = vmul.f32 %v675, %v675
        %v804 = vmul.f32 %v676, %v676
        %v805 = vmul.f32 %v677, %v677
        %v806 = vmul.f32 %v678, %v678
        %v807 = vmul.f32 %v679, %v679
        %v808 = vmul.f32 %v680, %v680
        %v809 = vmul.f32 %v681, %v681
        %v810 = vmul.f32 %v682, %v682
        %v811 = vmul.f32 %v683, %v683
        %v812 = vmul.f32 %v684, %v684
        %v813 = vmul.f32 %v685, %v685
        %v814 = vmul.f32 %v686, %v686
        %v815 = vmul.f32 %v687, %v687
        %v816 = vmul.f32 %v688, %v688
        %v817 = vmul.f32 %v689, %v689
        %v818 = vmul.f32 %v690, %v690
        %v819 = vmul.f32 %v691, %v691
        %v820 = vmul.f32 %v692, %v692
        %v821 = vmul.f32 %v693, %v693
        %v822 = vmul.f32 %v694, %v694
        %v823 = vmul.f32 %v695, %v695
        %v824 = vmul.f32 %v696, %v696
        %v825 = vmul.f32 %v697, %v697
        %v826 = vmul.f32 %v698, %v698
        %v827 = vmul.f32 %v699, %v699
        %v828 = vmul.f32 %v700, %v700
        %v829 = vmul.f32 %v701, %v701
        %v830 = vmul.f32 %v702, %v702
        %v831 = vmul.f32 %v703, %v703
        %v832 = vmul.f32 %v704, %v704
        %v833 = vmul.f32 %v705, %v705
        %v834 = vmul.f32 %v706, %v706
        %v835 = vmul.f32 %v707, %v707
        %v836 = vmul.f32 %v708, %v708
        %v837 = vmul.f32 %v709, %v709
        %v838 = vmul.f32 %v710, %v710
        %v839 = vmul.f32 %v711, %v711
        %v840 = vmul.f32 %v712, %v712
        %v841 = vmul.f32 %v713, %v713
        %v842 = vmul.f32 %v714, %v714
        %v843 = vmul.f32 %v715, %v715
        %v844 = vmul.f32 %v716, %v716
        %v845 = vmul.f32 %v717, %v717
        %v846 = vmul.f32 %v718, %v718
        %v847 = vmul.f32 %v719, %v719
        %v848 = vmul.f32 %v720, %v720
        %v849 = vmul.f32 %v721, %v721
        %v850 = vmul.f32 %v722, %v722
        %v851 = vmul.f32 %v723, %v723
        %v852 = vmul.f32 %v724, %v724
        %v853 = vmul.f32 %v725, %v725
        %v854 = vmul.f32 %v726, %v726
        %v855 = vmul.f32 %v727, %v727
        %v856 = vmul.f32 %v728, %v728
        %v857 = vmul.f32 %v729, %v729
        %v858 = vmul.f32 %v730, %v730
        %v859 = vmul.f32 %v731, %v731
        %v860 = vmul.f32 %v732, %v732
        %v861 = vmul.f32 %v733, %v733
        %v862 = vmul.f32 %v734, %v734
        %v863 = vmul.f32 %v735, %v735
        %v864 = vmul.f32 %v736, %v736
        %v865 = vmul.f32 %v737, %v737
        %v866 = vmul.f32 %v738, %v738
        %v867 = vmul.f32 %v739, %v739
        %v868 = vmul.f32 %v740, %v740
        %v869 = vmul.f32 %v741, %v741
        %v870 = vadd.f32 %v742, %v743
        %v871 = vadd.f32 %v870, %v744
        %v872 = vadd.f32 %v871, %v745
        %873 = vadd.xlane.f32.xlu0 %v872
        %v874 = vpop.xlane.xlu0 %873
        %v875 = vadd.f32 %v746, %v747
        %v876 = vadd.f32 %v875, %v748
        %v877 = vadd.f32 %v876, %v749
        %878 = vadd.xlane.f32.xlu0 %v877
        %v879 = vpop.xlane.xlu0 %878
        %v880 = vadd.f32 %v750, %v751
        %v881 = vadd.f32 %v880, %v752
        %v882 = vadd.f32 %v881, %v753
        %883 = vadd.xlane.f32.xlu0 %v882
        %v884 = vpop.xlane.xlu0 %883
        %v885 = vadd.f32 %v754, %v755
        %v886 = vadd.f32 %v885, %v756
        %v887 = vadd.f32 %v886, %v757
        %888 = vadd.xlane.f32.xlu0 %v887
        %v889 = vpop.xlane.xlu0 %888
        %v890 = vadd.f32 %v758, %v759
        %v891 = vadd.f32 %v890, %v760
        %v892 = vadd.f32 %v891, %v761
        %893 = vadd.xlane.f32.xlu0 %v892
        %v894 = vpop.xlane.xlu0 %893
        %v895 = vadd.f32 %v762, %v763
        %v896 = vadd.f32 %v895, %v764
        %v897 = vadd.f32 %v896, %v765
        %898 = vadd.xlane.f32.xlu0 %v897
        %v899 = vpop.xlane.xlu0 %898
        %v900 = vadd.f32 %v766, %v767
        %v901 = vadd.f32 %v900, %v768
        %v902 = vadd.f32 %v901, %v769
        %903 = vadd.xlane.f32.xlu0 %v902
        %v904 = vpop.xlane.xlu0 %903
        %v905 = vadd.f32 %v770, %v771
        %v906 = vadd.f32 %v905, %v772
        %v907 = vadd.f32 %v906, %v773
        %908 = vadd.xlane.f32.xlu0 %v907
        %v909 = vpop.xlane.xlu0 %908
        %v910 = vadd.f32 %v774, %v775
        %v911 = vadd.f32 %v910, %v776
        %v912 = vadd.f32 %v911, %v777
        %913 = vadd.xlane.f32.xlu0 %v912
        %v914 = vpop.xlane.xlu0 %913
        %v915 = vadd.f32 %v778, %v779
        %v916 = vadd.f32 %v915, %v780
        %v917 = vadd.f32 %v916, %v781
        %918 = vadd.xlane.f32.xlu0 %v917
        %v919 = vpop.xlane.xlu0 %918
        %v920 = vadd.f32 %v782, %v783
        %v921 = vadd.f32 %v920, %v784
        %v922 = vadd.f32 %v921, %v785
        %923 = vadd.xlane.f32.xlu0 %v922
        %v924 = vpop.xlane.xlu0 %923
        %v925 = vadd.f32 %v786, %v787
        %v926 = vadd.f32 %v925, %v788
        %v927 = vadd.f32 %v926, %v789
        %928 = vadd.xlane.f32.xlu0 %v927
        %v929 = vpop.xlane.xlu0 %928
        %v930 = vadd.f32 %v790, %v791
        %v931 = vadd.f32 %v930, %v792
        %v932 = vadd.f32 %v931, %v793
        %933 = vadd.xlane.f32.xlu0 %v932
        %v934 = vpop.xlane.xlu0 %933
        %v935 = vadd.f32 %v794, %v795
        %v936 = vadd.f32 %v935, %v796
        %v937 = vadd.f32 %v936, %v797
        %938 = vadd.xlane.f32.xlu0 %v937
        %v939 = vpop.xlane.xlu0 %938
        %v940 = vadd.f32 %v798, %v799
        %v941 = vadd.f32 %v940, %v800
        %v942 = vadd.f32 %v941, %v801
        %943 = vadd.xlane.f32.xlu0 %v942
        %v944 = vpop.xlane.xlu0 %943
        %v945 = vadd.f32 %v802, %v803
        %v946 = vadd.f32 %v945, %v804
        %v947 = vadd.f32 %v946, %v805
        %948 = vadd.xlane.f32.xlu0 %v947
        %v949 = vpop.xlane.xlu0 %948
        %v950 = vadd.f32 %v806, %v807
        %v951 = vadd.f32 %v950, %v808
        %v952 = vadd.f32 %v951, %v809
        %953 = vadd.xlane.f32.xlu0 %v952
        %v954 = vpop.xlane.xlu0 %953
        %v955 = vadd.f32 %v810, %v811
        %v956 = vadd.f32 %v955, %v812
        %v957 = vadd.f32 %v956, %v813
        %958 = vadd.xlane.f32.xlu0 %v957
        %v959 = vpop.xlane.xlu0 %958
        %v960 = vadd.f32 %v814, %v815
        %v961 = vadd.f32 %v960, %v816
        %v962 = vadd.f32 %v961, %v817
        %963 = vadd.xlane.f32.xlu0 %v962
        %v964 = vpop.xlane.xlu0 %963
        %v965 = vadd.f32 %v818, %v819
        %v966 = vadd.f32 %v965, %v820
        %v967 = vadd.f32 %v966, %v821
        %968 = vadd.xlane.f32.xlu0 %v967
        %v969 = vpop.xlane.xlu0 %968
        %v970 = vadd.f32 %v822, %v823
        %v971 = vadd.f32 %v970, %v824
        %v972 = vadd.f32 %v971, %v825
        %973 = vadd.xlane.f32.xlu0 %v972
        %v974 = vpop.xlane.xlu0 %973
        %v975 = vadd.f32 %v826, %v827
        %v976 = vadd.f32 %v975, %v828
        %v977 = vadd.f32 %v976, %v829
        %978 = vadd.xlane.f32.xlu0 %v977
        %v979 = vpop.xlane.xlu0 %978
        %v980 = vadd.f32 %v830, %v831
        %v981 = vadd.f32 %v980, %v832
        %v982 = vadd.f32 %v981, %v833
        %983 = vadd.xlane.f32.xlu0 %v982
        %v984 = vpop.xlane.xlu0 %983
        %v985 = vadd.f32 %v834, %v835
        %v986 = vadd.f32 %v985, %v836
        %v987 = vadd.f32 %v986, %v837
        %988 = vadd.xlane.f32.xlu0 %v987
        %v989 = vpop.xlane.xlu0 %988
        %v990 = vadd.f32 %v838, %v839
        %v991 = vadd.f32 %v990, %v840
        %v992 = vadd.f32 %v991, %v841
        %993 = vadd.xlane.f32.xlu0 %v992
        %v994 = vpop.xlane.xlu0 %993
        %v995 = vadd.f32 %v842, %v843
        %v996 = vadd.f32 %v995, %v844
        %v997 = vadd.f32 %v996, %v845
        %998 = vadd.xlane.f32.xlu0 %v997
        %v999 = vpop.xlane.xlu0 %998
        %v1000 = vadd.f32 %v846, %v847
        %v1001 = vadd.f32 %v1000, %v848
        %v1002 = vadd.f32 %v1001, %v849
        %1003 = vadd.xlane.f32.xlu0 %v1002
        %v1004 = vpop.xlane.xlu0 %1003
        %v1005 = vadd.f32 %v850, %v851
        %v1006 = vadd.f32 %v1005, %v852
        %v1007 = vadd.f32 %v1006, %v853
        %1008 = vadd.xlane.f32.xlu0 %v1007
        %v1009 = vpop.xlane.xlu0 %1008
        %v1010 = vadd.f32 %v854, %v855
        %v1011 = vadd.f32 %v1010, %v856
        %v1012 = vadd.f32 %v1011, %v857
        %1013 = vadd.xlane.f32.xlu0 %v1012
        %v1014 = vpop.xlane.xlu0 %1013
        %v1015 = vadd.f32 %v858, %v859
        %v1016 = vadd.f32 %v1015, %v860
        %v1017 = vadd.f32 %v1016, %v861
        %1018 = vadd.xlane.f32.xlu0 %v1017
        %v1019 = vpop.xlane.xlu0 %1018
        %v1020 = vadd.f32 %v862, %v863
        %v1021 = vadd.f32 %v1020, %v864
        %v1022 = vadd.f32 %v1021, %v865
        %1023 = vadd.xlane.f32.xlu0 %v1022
        %v1024 = vpop.xlane.xlu0 %1023
        %v1025 = vadd.f32 %v866, %v867
        %v1026 = vadd.f32 %v1025, %v868
        %v1027 = vadd.f32 %v1026, %v869
        %1028 = vadd.xlane.f32.xlu0 %v1027
        %v1029 = vpop.xlane.xlu0 %1028
        %v1030 = vmul.f32 %v874, %v581
        %v1031 = vmul.f32 %v879, %v581
        %v1032 = vmul.f32 %v884, %v581
        %v1033 = vmul.f32 %v889, %v581
        %v1034 = vmul.f32 %v894, %v581
        %v1035 = vmul.f32 %v899, %v581
        %v1036 = vmul.f32 %v904, %v581
        %v1037 = vmul.f32 %v909, %v581
        %v1038 = vmul.f32 %v914, %v581
        %v1039 = vmul.f32 %v919, %v581
        %v1040 = vmul.f32 %v924, %v581
        %v1041 = vmul.f32 %v929, %v581
        %v1042 = vmul.f32 %v934, %v581
        %v1043 = vmul.f32 %v939, %v581
        %v1044 = vmul.f32 %v944, %v581
        %v1045 = vmul.f32 %v949, %v581
        %v1046 = vmul.f32 %v954, %v581
        %v1047 = vmul.f32 %v959, %v581
        %v1048 = vmul.f32 %v964, %v581
        %v1049 = vmul.f32 %v969, %v581
        %v1050 = vmul.f32 %v974, %v581
        %v1051 = vmul.f32 %v979, %v581
        %v1052 = vmul.f32 %v984, %v581
        %v1053 = vmul.f32 %v989, %v581
        %v1054 = vmul.f32 %v994, %v581
        %v1055 = vmul.f32 %v999, %v581
        %v1056 = vmul.f32 %v1004, %v581
        %v1057 = vmul.f32 %v1009, %v581
        %v1058 = vmul.f32 %v1014, %v581
        %v1059 = vmul.f32 %v1019, %v581
        %v1060 = vmul.f32 %v1024, %v581
        %v1061 = vmul.f32 %v1029, %v581
        %v1062 = vadd.f32 %v1030, 1e-05
        %v1063 = vadd.f32 %v1031, 1e-05
        %v1064 = vadd.f32 %v1032, 1e-05
        %v1065 = vadd.f32 %v1033, 1e-05
        %v1066 = vadd.f32 %v1034, 1e-05
        %v1067 = vadd.f32 %v1035, 1e-05
        %v1068 = vadd.f32 %v1036, 1e-05
        %v1069 = vadd.f32 %v1037, 1e-05
        %v1070 = vadd.f32 %v1038, 1e-05
        %v1071 = vadd.f32 %v1039, 1e-05
        %v1072 = vadd.f32 %v1040, 1e-05
        %v1073 = vadd.f32 %v1041, 1e-05
        %v1074 = vadd.f32 %v1042, 1e-05
        %v1075 = vadd.f32 %v1043, 1e-05
        %v1076 = vadd.f32 %v1044, 1e-05
        %v1077 = vadd.f32 %v1045, 1e-05
        %v1078 = vadd.f32 %v1046, 1e-05
        %v1079 = vadd.f32 %v1047, 1e-05
        %v1080 = vadd.f32 %v1048, 1e-05
        %v1081 = vadd.f32 %v1049, 1e-05
        %v1082 = vadd.f32 %v1050, 1e-05
        %v1083 = vadd.f32 %v1051, 1e-05
        %v1084 = vadd.f32 %v1052, 1e-05
        %v1085 = vadd.f32 %v1053, 1e-05
        %v1086 = vadd.f32 %v1054, 1e-05
        %v1087 = vadd.f32 %v1055, 1e-05
        %v1088 = vadd.f32 %v1056, 1e-05
        %v1089 = vadd.f32 %v1057, 1e-05
        %v1090 = vadd.f32 %v1058, 1e-05
        %v1091 = vadd.f32 %v1059, 1e-05
        %v1092 = vadd.f32 %v1060, 1e-05
        %v1093 = vadd.f32 %v1061, 1e-05
        %v1094 = vrsqrt.pop %v1062
        %v1095 = vmul.f32 %v1094, %v1062
        %v1096 = vmul.f32 %v1095, %v1094
        %v1097 = vmul.f32 0.5, %v1096
        %v1098 = vsub.f32 1.5, %v1097
        %v1099 = vmul.f32 %v1094, %v1098
        %vm1100 = vweird.f32 %v1062
        %vm1101 = vweird.f32 %v1094
        %vm1102 = vmor %vm1100, %vm1101
        %v1103 = vsel %vm1102, %v1094, %v1099
        %v1104 = vrsqrt.pop %v1063
        %v1105 = vmul.f32 %v1104, %v1063
        %v1106 = vmul.f32 %v1105, %v1104
        %v1107 = vmul.f32 0.5, %v1106
        %v1108 = vsub.f32 1.5, %v1107
        %v1109 = vmul.f32 %v1104, %v1108
        %vm1110 = vweird.f32 %v1063
        %vm1111 = vweird.f32 %v1104
        %vm1112 = vmor %vm1110, %vm1111
        %v1113 = vsel %vm1112, %v1104, %v1109
        %v1114 = vrsqrt.pop %v1064
        %v1115 = vmul.f32 %v1114, %v1064
        %v1116 = vmul.f32 %v1115, %v1114
        %v1117 = vmul.f32 0.5, %v1116
        %v1118 = vsub.f32 1.5, %v1117
        %v1119 = vmul.f32 %v1114, %v1118
        %vm1120 = vweird.f32 %v1064
        %vm1121 = vweird.f32 %v1114
        %vm1122 = vmor %vm1120, %vm1121
        %v1123 = vsel %vm1122, %v1114, %v1119
        %v1124 = vrsqrt.pop %v1065
        %v1125 = vmul.f32 %v1124, %v1065
        %v1126 = vmul.f32 %v1125, %v1124
        %v1127 = vmul.f32 0.5, %v1126
        %v1128 = vsub.f32 1.5, %v1127
        %v1129 = vmul.f32 %v1124, %v1128
        %vm1130 = vweird.f32 %v1065
        %vm1131 = vweird.f32 %v1124
        %vm1132 = vmor %vm1130, %vm1131
        %v1133 = vsel %vm1132, %v1124, %v1129
        %v1134 = vrsqrt.pop %v1066
        %v1135 = vmul.f32 %v1134, %v1066
        %v1136 = vmul.f32 %v1135, %v1134
        %v1137 = vmul.f32 0.5, %v1136
        %v1138 = vsub.f32 1.5, %v1137
        %v1139 = vmul.f32 %v1134, %v1138
        %vm1140 = vweird.f32 %v1066
        %vm1141 = vweird.f32 %v1134
        %vm1142 = vmor %vm1140, %vm1141
        %v1143 = vsel %vm1142, %v1134, %v1139
        %v1144 = vrsqrt.pop %v1067
        %v1145 = vmul.f32 %v1144, %v1067
        %v1146 = vmul.f32 %v1145, %v1144
        %v1147 = vmul.f32 0.5, %v1146
        %v1148 = vsub.f32 1.5, %v1147
        %v1149 = vmul.f32 %v1144, %v1148
        %vm1150 = vweird.f32 %v1067
        %vm1151 = vweird.f32 %v1144
        %vm1152 = vmor %vm1150, %vm1151
        %v1153 = vsel %vm1152, %v1144, %v1149
        %v1154 = vrsqrt.pop %v1068
        %v1155 = vmul.f32 %v1154, %v1068
        %v1156 = vmul.f32 %v1155, %v1154
        %v1157 = vmul.f32 0.5, %v1156
        %v1158 = vsub.f32 1.5, %v1157
        %v1159 = vmul.f32 %v1154, %v1158
        %vm1160 = vweird.f32 %v1068
        %vm1161 = vweird.f32 %v1154
        %vm1162 = vmor %vm1160, %vm1161
        %v1163 = vsel %vm1162, %v1154, %v1159
        %v1164 = vrsqrt.pop %v1069
        %v1165 = vmul.f32 %v1164, %v1069
        %v1166 = vmul.f32 %v1165, %v1164
        %v1167 = vmul.f32 0.5, %v1166
        %v1168 = vsub.f32 1.5, %v1167
        %v1169 = vmul.f32 %v1164, %v1168
        %vm1170 = vweird.f32 %v1069
        %vm1171 = vweird.f32 %v1164
        %vm1172 = vmor %vm1170, %vm1171
        %v1173 = vsel %vm1172, %v1164, %v1169
        %v1174 = vrsqrt.pop %v1070
        %v1175 = vmul.f32 %v1174, %v1070
        %v1176 = vmul.f32 %v1175, %v1174
        %v1177 = vmul.f32 0.5, %v1176
        %v1178 = vsub.f32 1.5, %v1177
        %v1179 = vmul.f32 %v1174, %v1178
        %vm1180 = vweird.f32 %v1070
        %vm1181 = vweird.f32 %v1174
        %vm1182 = vmor %vm1180, %vm1181
        %v1183 = vsel %vm1182, %v1174, %v1179
        %v1184 = vrsqrt.pop %v1071
        %v1185 = vmul.f32 %v1184, %v1071
        %v1186 = vmul.f32 %v1185, %v1184
        %v1187 = vmul.f32 0.5, %v1186
        %v1188 = vsub.f32 1.5, %v1187
        %v1189 = vmul.f32 %v1184, %v1188
        %vm1190 = vweird.f32 %v1071
        %vm1191 = vweird.f32 %v1184
        %vm1192 = vmor %vm1190, %vm1191
        %v1193 = vsel %vm1192, %v1184, %v1189
        %v1194 = vrsqrt.pop %v1072
        %v1195 = vmul.f32 %v1194, %v1072
        %v1196 = vmul.f32 %v1195, %v1194
        %v1197 = vmul.f32 0.5, %v1196
        %v1198 = vsub.f32 1.5, %v1197
        %v1199 = vmul.f32 %v1194, %v1198
        %vm1200 = vweird.f32 %v1072
        %vm1201 = vweird.f32 %v1194
        %vm1202 = vmor %vm1200, %vm1201
        %v1203 = vsel %vm1202, %v1194, %v1199
        %v1204 = vrsqrt.pop %v1073
        %v1205 = vmul.f32 %v1204, %v1073
        %v1206 = vmul.f32 %v1205, %v1204
        %v1207 = vmul.f32 0.5, %v1206
        %v1208 = vsub.f32 1.5, %v1207
        %v1209 = vmul.f32 %v1204, %v1208
        %vm1210 = vweird.f32 %v1073
        %vm1211 = vweird.f32 %v1204
        %vm1212 = vmor %vm1210, %vm1211
        %v1213 = vsel %vm1212, %v1204, %v1209
        %v1214 = vrsqrt.pop %v1074
        %v1215 = vmul.f32 %v1214, %v1074
        %v1216 = vmul.f32 %v1215, %v1214
        %v1217 = vmul.f32 0.5, %v1216
        %v1218 = vsub.f32 1.5, %v1217
        %v1219 = vmul.f32 %v1214, %v1218
        %vm1220 = vweird.f32 %v1074
        %vm1221 = vweird.f32 %v1214
        %vm1222 = vmor %vm1220, %vm1221
        %v1223 = vsel %vm1222, %v1214, %v1219
        %v1224 = vrsqrt.pop %v1075
        %v1225 = vmul.f32 %v1224, %v1075
        %v1226 = vmul.f32 %v1225, %v1224
        %v1227 = vmul.f32 0.5, %v1226
        %v1228 = vsub.f32 1.5, %v1227
        %v1229 = vmul.f32 %v1224, %v1228
        %vm1230 = vweird.f32 %v1075
        %vm1231 = vweird.f32 %v1224
        %vm1232 = vmor %vm1230, %vm1231
        %v1233 = vsel %vm1232, %v1224, %v1229
        %v1234 = vrsqrt.pop %v1076
        %v1235 = vmul.f32 %v1234, %v1076
        %v1236 = vmul.f32 %v1235, %v1234
        %v1237 = vmul.f32 0.5, %v1236
        %v1238 = vsub.f32 1.5, %v1237
        %v1239 = vmul.f32 %v1234, %v1238
        %vm1240 = vweird.f32 %v1076
        %vm1241 = vweird.f32 %v1234
        %vm1242 = vmor %vm1240, %vm1241
        %v1243 = vsel %vm1242, %v1234, %v1239
        %v1244 = vrsqrt.pop %v1077
        %v1245 = vmul.f32 %v1244, %v1077
        %v1246 = vmul.f32 %v1245, %v1244
        %v1247 = vmul.f32 0.5, %v1246
        %v1248 = vsub.f32 1.5, %v1247
        %v1249 = vmul.f32 %v1244, %v1248
        %vm1250 = vweird.f32 %v1077
        %vm1251 = vweird.f32 %v1244
        %vm1252 = vmor %vm1250, %vm1251
        %v1253 = vsel %vm1252, %v1244, %v1249
        %v1254 = vrsqrt.pop %v1078
        %v1255 = vmul.f32 %v1254, %v1078
        %v1256 = vmul.f32 %v1255, %v1254
        %v1257 = vmul.f32 0.5, %v1256
        %v1258 = vsub.f32 1.5, %v1257
        %v1259 = vmul.f32 %v1254, %v1258
        %vm1260 = vweird.f32 %v1078
        %vm1261 = vweird.f32 %v1254
        %vm1262 = vmor %vm1260, %vm1261
        %v1263 = vsel %vm1262, %v1254, %v1259
        %v1264 = vrsqrt.pop %v1079
        %v1265 = vmul.f32 %v1264, %v1079
        %v1266 = vmul.f32 %v1265, %v1264
        %v1267 = vmul.f32 0.5, %v1266
        %v1268 = vsub.f32 1.5, %v1267
        %v1269 = vmul.f32 %v1264, %v1268
        %vm1270 = vweird.f32 %v1079
        %vm1271 = vweird.f32 %v1264
        %vm1272 = vmor %vm1270, %vm1271
        %v1273 = vsel %vm1272, %v1264, %v1269
        %v1274 = vrsqrt.pop %v1080
        %v1275 = vmul.f32 %v1274, %v1080
        %v1276 = vmul.f32 %v1275, %v1274
        %v1277 = vmul.f32 0.5, %v1276
        %v1278 = vsub.f32 1.5, %v1277
        %v1279 = vmul.f32 %v1274, %v1278
        %vm1280 = vweird.f32 %v1080
        %vm1281 = vweird.f32 %v1274
        %vm1282 = vmor %vm1280, %vm1281
        %v1283 = vsel %vm1282, %v1274, %v1279
        %v1284 = vrsqrt.pop %v1081
        %v1285 = vmul.f32 %v1284, %v1081
        %v1286 = vmul.f32 %v1285, %v1284
        %v1287 = vmul.f32 0.5, %v1286
        %v1288 = vsub.f32 1.5, %v1287
        %v1289 = vmul.f32 %v1284, %v1288
        %vm1290 = vweird.f32 %v1081
        %vm1291 = vweird.f32 %v1284
        %vm1292 = vmor %vm1290, %vm1291
        %v1293 = vsel %vm1292, %v1284, %v1289
        %v1294 = vrsqrt.pop %v1082
        %v1295 = vmul.f32 %v1294, %v1082
        %v1296 = vmul.f32 %v1295, %v1294
        %v1297 = vmul.f32 0.5, %v1296
        %v1298 = vsub.f32 1.5, %v1297
        %v1299 = vmul.f32 %v1294, %v1298
        %vm1300 = vweird.f32 %v1082
        %vm1301 = vweird.f32 %v1294
        %vm1302 = vmor %vm1300, %vm1301
        %v1303 = vsel %vm1302, %v1294, %v1299
        %v1304 = vrsqrt.pop %v1083
        %v1305 = vmul.f32 %v1304, %v1083
        %v1306 = vmul.f32 %v1305, %v1304
        %v1307 = vmul.f32 0.5, %v1306
        %v1308 = vsub.f32 1.5, %v1307
        %v1309 = vmul.f32 %v1304, %v1308
        %vm1310 = vweird.f32 %v1083
        %vm1311 = vweird.f32 %v1304
        %vm1312 = vmor %vm1310, %vm1311
        %v1313 = vsel %vm1312, %v1304, %v1309
        %v1314 = vrsqrt.pop %v1084
        %v1315 = vmul.f32 %v1314, %v1084
        %v1316 = vmul.f32 %v1315, %v1314
        %v1317 = vmul.f32 0.5, %v1316
        %v1318 = vsub.f32 1.5, %v1317
        %v1319 = vmul.f32 %v1314, %v1318
        %vm1320 = vweird.f32 %v1084
        %vm1321 = vweird.f32 %v1314
        %vm1322 = vmor %vm1320, %vm1321
        %v1323 = vsel %vm1322, %v1314, %v1319
        %v1324 = vrsqrt.pop %v1085
        %v1325 = vmul.f32 %v1324, %v1085
        %v1326 = vmul.f32 %v1325, %v1324
        %v1327 = vmul.f32 0.5, %v1326
        %v1328 = vsub.f32 1.5, %v1327
        %v1329 = vmul.f32 %v1324, %v1328
        %vm1330 = vweird.f32 %v1085
        %vm1331 = vweird.f32 %v1324
        %vm1332 = vmor %vm1330, %vm1331
        %v1333 = vsel %vm1332, %v1324, %v1329
        %v1334 = vrsqrt.pop %v1086
        %v1335 = vmul.f32 %v1334, %v1086
        %v1336 = vmul.f32 %v1335, %v1334
        %v1337 = vmul.f32 0.5, %v1336
        %v1338 = vsub.f32 1.5, %v1337
        %v1339 = vmul.f32 %v1334, %v1338
        %vm1340 = vweird.f32 %v1086
        %vm1341 = vweird.f32 %v1334
        %vm1342 = vmor %vm1340, %vm1341
        %v1343 = vsel %vm1342, %v1334, %v1339
        %v1344 = vrsqrt.pop %v1087
        %v1345 = vmul.f32 %v1344, %v1087
        %v1346 = vmul.f32 %v1345, %v1344
        %v1347 = vmul.f32 0.5, %v1346
        %v1348 = vsub.f32 1.5, %v1347
        %v1349 = vmul.f32 %v1344, %v1348
        %vm1350 = vweird.f32 %v1087
        %vm1351 = vweird.f32 %v1344
        %vm1352 = vmor %vm1350, %vm1351
        %v1353 = vsel %vm1352, %v1344, %v1349
        %v1354 = vrsqrt.pop %v1088
        %v1355 = vmul.f32 %v1354, %v1088
        %v1356 = vmul.f32 %v1355, %v1354
        %v1357 = vmul.f32 0.5, %v1356
        %v1358 = vsub.f32 1.5, %v1357
        %v1359 = vmul.f32 %v1354, %v1358
        %vm1360 = vweird.f32 %v1088
        %vm1361 = vweird.f32 %v1354
        %vm1362 = vmor %vm1360, %vm1361
        %v1363 = vsel %vm1362, %v1354, %v1359
        %v1364 = vrsqrt.pop %v1089
        %v1365 = vmul.f32 %v1364, %v1089
        %v1366 = vmul.f32 %v1365, %v1364
        %v1367 = vmul.f32 0.5, %v1366
        %v1368 = vsub.f32 1.5, %v1367
        %v1369 = vmul.f32 %v1364, %v1368
        %vm1370 = vweird.f32 %v1089
        %vm1371 = vweird.f32 %v1364
        %vm1372 = vmor %vm1370, %vm1371
        %v1373 = vsel %vm1372, %v1364, %v1369
        %v1374 = vrsqrt.pop %v1090
        %v1375 = vmul.f32 %v1374, %v1090
        %v1376 = vmul.f32 %v1375, %v1374
        %v1377 = vmul.f32 0.5, %v1376
        %v1378 = vsub.f32 1.5, %v1377
        %v1379 = vmul.f32 %v1374, %v1378
        %vm1380 = vweird.f32 %v1090
        %vm1381 = vweird.f32 %v1374
        %vm1382 = vmor %vm1380, %vm1381
        %v1383 = vsel %vm1382, %v1374, %v1379
        %v1384 = vrsqrt.pop %v1091
        %v1385 = vmul.f32 %v1384, %v1091
        %v1386 = vmul.f32 %v1385, %v1384
        %v1387 = vmul.f32 0.5, %v1386
        %v1388 = vsub.f32 1.5, %v1387
        %v1389 = vmul.f32 %v1384, %v1388
        %vm1390 = vweird.f32 %v1091
        %vm1391 = vweird.f32 %v1384
        %vm1392 = vmor %vm1390, %vm1391
        %v1393 = vsel %vm1392, %v1384, %v1389
        %v1394 = vrsqrt.pop %v1092
        %v1395 = vmul.f32 %v1394, %v1092
        %v1396 = vmul.f32 %v1395, %v1394
        %v1397 = vmul.f32 0.5, %v1396
        %v1398 = vsub.f32 1.5, %v1397
        %v1399 = vmul.f32 %v1394, %v1398
        %vm1400 = vweird.f32 %v1092
        %vm1401 = vweird.f32 %v1394
        %vm1402 = vmor %vm1400, %vm1401
        %v1403 = vsel %vm1402, %v1394, %v1399
        %v1404 = vrsqrt.pop %v1093
        %v1405 = vmul.f32 %v1404, %v1093
        %v1406 = vmul.f32 %v1405, %v1404
        %v1407 = vmul.f32 0.5, %v1406
        %v1408 = vsub.f32 1.5, %v1407
        %v1409 = vmul.f32 %v1404, %v1408
        %vm1410 = vweird.f32 %v1093
        %vm1411 = vweird.f32 %v1404
        %vm1412 = vmor %vm1410, %vm1411
        %v1413 = vsel %vm1412, %v1404, %v1409
        %v1414 = vmul.f32 %v614, %v1103
        %v1415 = vmul.f32 %v615, %v1103
        %v1416 = vmul.f32 %v616, %v1103
        %v1417 = vmul.f32 %v617, %v1103
        %v1418 = vmul.f32 %v618, %v1113
        %v1419 = vmul.f32 %v619, %v1113
        %v1420 = vmul.f32 %v620, %v1113
        %v1421 = vmul.f32 %v621, %v1113
        %v1422 = vmul.f32 %v622, %v1123
        %v1423 = vmul.f32 %v623, %v1123
        %v1424 = vmul.f32 %v624, %v1123
        %v1425 = vmul.f32 %v625, %v1123
        %v1426 = vmul.f32 %v626, %v1133
        %v1427 = vmul.f32 %v627, %v1133
        %v1428 = vmul.f32 %v628, %v1133
        %v1429 = vmul.f32 %v629, %v1133
        %v1430 = vmul.f32 %v630, %v1143
        %v1431 = vmul.f32 %v631, %v1143
        %v1432 = vmul.f32 %v632, %v1143
        %v1433 = vmul.f32 %v633, %v1143
        %v1434 = vmul.f32 %v634, %v1153
        %v1435 = vmul.f32 %v635, %v1153
        %v1436 = vmul.f32 %v636, %v1153
        %v1437 = vmul.f32 %v637, %v1153
        %v1438 = vmul.f32 %v638, %v1163
        %v1439 = vmul.f32 %v639, %v1163
        %v1440 = vmul.f32 %v640, %v1163
        %v1441 = vmul.f32 %v641, %v1163
        %v1442 = vmul.f32 %v642, %v1173
        %v1443 = vmul.f32 %v643, %v1173
        %v1444 = vmul.f32 %v644, %v1173
        %v1445 = vmul.f32 %v645, %v1173
        %v1446 = vmul.f32 %v646, %v1183
        %v1447 = vmul.f32 %v647, %v1183
        %v1448 = vmul.f32 %v648, %v1183
        %v1449 = vmul.f32 %v649, %v1183
        %v1450 = vmul.f32 %v650, %v1193
        %v1451 = vmul.f32 %v651, %v1193
        %v1452 = vmul.f32 %v652, %v1193
        %v1453 = vmul.f32 %v653, %v1193
        %v1454 = vmul.f32 %v654, %v1203
        %v1455 = vmul.f32 %v655, %v1203
        %v1456 = vmul.f32 %v656, %v1203
        %v1457 = vmul.f32 %v657, %v1203
        %v1458 = vmul.f32 %v658, %v1213
        %v1459 = vmul.f32 %v659, %v1213
        %v1460 = vmul.f32 %v660, %v1213
        %v1461 = vmul.f32 %v661, %v1213
        %v1462 = vmul.f32 %v662, %v1223
        %v1463 = vmul.f32 %v663, %v1223
        %v1464 = vmul.f32 %v664, %v1223
        %v1465 = vmul.f32 %v665, %v1223
        %v1466 = vmul.f32 %v666, %v1233
        %v1467 = vmul.f32 %v667, %v1233
        %v1468 = vmul.f32 %v668, %v1233
        %v1469 = vmul.f32 %v669, %v1233
        %v1470 = vmul.f32 %v670, %v1243
        %v1471 = vmul.f32 %v671, %v1243
        %v1472 = vmul.f32 %v672, %v1243
        %v1473 = vmul.f32 %v673, %v1243
        %v1474 = vmul.f32 %v674, %v1253
        %v1475 = vmul.f32 %v675, %v1253
        %v1476 = vmul.f32 %v676, %v1253
        %v1477 = vmul.f32 %v677, %v1253
        %v1478 = vmul.f32 %v678, %v1263
        %v1479 = vmul.f32 %v679, %v1263
        %v1480 = vmul.f32 %v680, %v1263
        %v1481 = vmul.f32 %v681, %v1263
        %v1482 = vmul.f32 %v682, %v1273
        %v1483 = vmul.f32 %v683, %v1273
        %v1484 = vmul.f32 %v684, %v1273
        %v1485 = vmul.f32 %v685, %v1273
        %v1486 = vmul.f32 %v686, %v1283
        %v1487 = vmul.f32 %v687, %v1283
        %v1488 = vmul.f32 %v688, %v1283
        %v1489 = vmul.f32 %v689, %v1283
        %v1490 = vmul.f32 %v690, %v1293
        %v1491 = vmul.f32 %v691, %v1293
        %v1492 = vmul.f32 %v692, %v1293
        %v1493 = vmul.f32 %v693, %v1293
        %v1494 = vmul.f32 %v694, %v1303
        %v1495 = vmul.f32 %v695, %v1303
        %v1496 = vmul.f32 %v696, %v1303
        %v1497 = vmul.f32 %v697, %v1303
        %v1498 = vmul.f32 %v698, %v1313
        %v1499 = vmul.f32 %v699, %v1313
        %v1500 = vmul.f32 %v700, %v1313
        %v1501 = vmul.f32 %v701, %v1313
        %v1502 = vmul.f32 %v702, %v1323
        %v1503 = vmul.f32 %v703, %v1323
        %v1504 = vmul.f32 %v704, %v1323
        %v1505 = vmul.f32 %v705, %v1323
        %v1506 = vmul.f32 %v706, %v1333
        %v1507 = vmul.f32 %v707, %v1333
        %v1508 = vmul.f32 %v708, %v1333
        %v1509 = vmul.f32 %v709, %v1333
        %v1510 = vmul.f32 %v710, %v1343
        %v1511 = vmul.f32 %v711, %v1343
        %v1512 = vmul.f32 %v712, %v1343
        %v1513 = vmul.f32 %v713, %v1343
        %v1514 = vmul.f32 %v714, %v1353
        %v1515 = vmul.f32 %v715, %v1353
        %v1516 = vmul.f32 %v716, %v1353
        %v1517 = vmul.f32 %v717, %v1353
        %v1518 = vmul.f32 %v718, %v1363
        %v1519 = vmul.f32 %v719, %v1363
        %v1520 = vmul.f32 %v720, %v1363
        %v1521 = vmul.f32 %v721, %v1363
        %v1522 = vmul.f32 %v722, %v1373
        %v1523 = vmul.f32 %v723, %v1373
        %v1524 = vmul.f32 %v724, %v1373
        %v1525 = vmul.f32 %v725, %v1373
        %v1526 = vmul.f32 %v726, %v1383
        %v1527 = vmul.f32 %v727, %v1383
        %v1528 = vmul.f32 %v728, %v1383
        %v1529 = vmul.f32 %v729, %v1383
        %v1530 = vmul.f32 %v730, %v1393
        %v1531 = vmul.f32 %v731, %v1393
        %v1532 = vmul.f32 %v732, %v1393
        %v1533 = vmul.f32 %v733, %v1393
        %v1534 = vmul.f32 %v734, %v1403
        %v1535 = vmul.f32 %v735, %v1403
        %v1536 = vmul.f32 %v736, %v1403
        %v1537 = vmul.f32 %v737, %v1403
        %v1538 = vmul.f32 %v738, %v1413
        %v1539 = vmul.f32 %v739, %v1413
        %v1540 = vmul.f32 %v740, %v1413
        %v1541 = vmul.f32 %v741, %v1413
        %v1542 = vld [vmem:[#allocation5] sm:$0xf]
        %v1544 = vperm.slane %v1542, 0
        %v1545 = vperm.slane %v1542, 1
        %v1546 = vperm.slane %v1542, 2
        %v1547 = vperm.slane %v1542, 3
        %v1552 = vmul.f32 %v1414, %v1544
        %v1553 = vmul.f32 %v1415, %v1545
        %v1554 = vmul.f32 %v1416, %v1546
        %v1555 = vmul.f32 %v1417, %v1547
        %v1556 = vmul.f32 %v1418, %v1544
        %v1557 = vmul.f32 %v1419, %v1545
        %v1558 = vmul.f32 %v1420, %v1546
        %v1559 = vmul.f32 %v1421, %v1547
        %v1560 = vmul.f32 %v1422, %v1544
        %v1561 = vmul.f32 %v1423, %v1545
        %v1562 = vmul.f32 %v1424, %v1546
        %v1563 = vmul.f32 %v1425, %v1547
        %v1564 = vmul.f32 %v1426, %v1544
        %v1565 = vmul.f32 %v1427, %v1545
        %v1566 = vmul.f32 %v1428, %v1546
        %v1567 = vmul.f32 %v1429, %v1547
        %v1568 = vmul.f32 %v1430, %v1544
        %v1569 = vmul.f32 %v1431, %v1545
        %v1570 = vmul.f32 %v1432, %v1546
        %v1571 = vmul.f32 %v1433, %v1547
        %v1572 = vmul.f32 %v1434, %v1544
        %v1573 = vmul.f32 %v1435, %v1545
        %v1574 = vmul.f32 %v1436, %v1546
        %v1575 = vmul.f32 %v1437, %v1547
        %v1576 = vmul.f32 %v1438, %v1544
        %v1577 = vmul.f32 %v1439, %v1545
        %v1578 = vmul.f32 %v1440, %v1546
        %v1579 = vmul.f32 %v1441, %v1547
        %v1580 = vmul.f32 %v1442, %v1544
        %v1581 = vmul.f32 %v1443, %v1545
        %v1582 = vmul.f32 %v1444, %v1546
        %v1583 = vmul.f32 %v1445, %v1547
        %v1584 = vmul.f32 %v1446, %v1544
        %v1585 = vmul.f32 %v1447, %v1545
        %v1586 = vmul.f32 %v1448, %v1546
        %v1587 = vmul.f32 %v1449, %v1547
        %v1588 = vmul.f32 %v1450, %v1544
        %v1589 = vmul.f32 %v1451, %v1545
        %v1590 = vmul.f32 %v1452, %v1546
        %v1591 = vmul.f32 %v1453, %v1547
        %v1592 = vmul.f32 %v1454, %v1544
        %v1593 = vmul.f32 %v1455, %v1545
        %v1594 = vmul.f32 %v1456, %v1546
        %v1595 = vmul.f32 %v1457, %v1547
        %v1596 = vmul.f32 %v1458, %v1544
        %v1597 = vmul.f32 %v1459, %v1545
        %v1598 = vmul.f32 %v1460, %v1546
        %v1599 = vmul.f32 %v1461, %v1547
        %v1600 = vmul.f32 %v1462, %v1544
        %v1601 = vmul.f32 %v1463, %v1545
        %v1602 = vmul.f32 %v1464, %v1546
        %v1603 = vmul.f32 %v1465, %v1547
        %v1604 = vmul.f32 %v1466, %v1544
        %v1605 = vmul.f32 %v1467, %v1545
        %v1606 = vmul.f32 %v1468, %v1546
        %v1607 = vmul.f32 %v1469, %v1547
        %v1608 = vmul.f32 %v1470, %v1544
        %v1609 = vmul.f32 %v1471, %v1545
        %v1610 = vmul.f32 %v1472, %v1546
        %v1611 = vmul.f32 %v1473, %v1547
        %v1612 = vmul.f32 %v1474, %v1544
        %v1613 = vmul.f32 %v1475, %v1545
        %v1614 = vmul.f32 %v1476, %v1546
        %v1615 = vmul.f32 %v1477, %v1547
        %v1616 = vmul.f32 %v1478, %v1544
        %v1617 = vmul.f32 %v1479, %v1545
        %v1618 = vmul.f32 %v1480, %v1546
        %v1619 = vmul.f32 %v1481, %v1547
        %v1620 = vmul.f32 %v1482, %v1544
        %v1621 = vmul.f32 %v1483, %v1545
        %v1622 = vmul.f32 %v1484, %v1546
        %v1623 = vmul.f32 %v1485, %v1547
        %v1624 = vmul.f32 %v1486, %v1544
        %v1625 = vmul.f32 %v1487, %v1545
        %v1626 = vmul.f32 %v1488, %v1546
        %v1627 = vmul.f32 %v1489, %v1547
        %v1628 = vmul.f32 %v1490, %v1544
        %v1629 = vmul.f32 %v1491, %v1545
        %v1630 = vmul.f32 %v1492, %v1546
        %v1631 = vmul.f32 %v1493, %v1547
        %v1632 = vmul.f32 %v1494, %v1544
        %v1633 = vmul.f32 %v1495, %v1545
        %v1634 = vmul.f32 %v1496, %v1546
        %v1635 = vmul.f32 %v1497, %v1547
        %v1636 = vmul.f32 %v1498, %v1544
        %v1637 = vmul.f32 %v1499, %v1545
        %v1638 = vmul.f32 %v1500, %v1546
        %v1639 = vmul.f32 %v1501, %v1547
        %v1640 = vmul.f32 %v1502, %v1544
        %v1641 = vmul.f32 %v1503, %v1545
        %v1642 = vmul.f32 %v1504, %v1546
        %v1643 = vmul.f32 %v1505, %v1547
        %v1644 = vmul.f32 %v1506, %v1544
        %v1645 = vmul.f32 %v1507, %v1545
        %v1646 = vmul.f32 %v1508, %v1546
        %v1647 = vmul.f32 %v1509, %v1547
        %v1648 = vmul.f32 %v1510, %v1544
        %v1649 = vmul.f32 %v1511, %v1545
        %v1650 = vmul.f32 %v1512, %v1546
        %v1651 = vmul.f32 %v1513, %v1547
        %v1652 = vmul.f32 %v1514, %v1544
        %v1653 = vmul.f32 %v1515, %v1545
        %v1654 = vmul.f32 %v1516, %v1546
        %v1655 = vmul.f32 %v1517, %v1547
        %v1656 = vmul.f32 %v1518, %v1544
        %v1657 = vmul.f32 %v1519, %v1545
        %v1658 = vmul.f32 %v1520, %v1546
        %v1659 = vmul.f32 %v1521, %v1547
        %v1660 = vmul.f32 %v1522, %v1544
        %v1661 = vmul.f32 %v1523, %v1545
        %v1662 = vmul.f32 %v1524, %v1546
        %v1663 = vmul.f32 %v1525, %v1547
        %v1664 = vmul.f32 %v1526, %v1544
        %v1665 = vmul.f32 %v1527, %v1545
        %v1666 = vmul.f32 %v1528, %v1546
        %v1667 = vmul.f32 %v1529, %v1547
        %v1668 = vmul.f32 %v1530, %v1544
        %v1669 = vmul.f32 %v1531, %v1545
        %v1670 = vmul.f32 %v1532, %v1546
        %v1671 = vmul.f32 %v1533, %v1547
        %v1672 = vmul.f32 %v1534, %v1544
        %v1673 = vmul.f32 %v1535, %v1545
        %v1674 = vmul.f32 %v1536, %v1546
        %v1675 = vmul.f32 %v1537, %v1547
        %v1676 = vmul.f32 %v1538, %v1544
        %v1677 = vmul.f32 %v1539, %v1545
        %v1678 = vmul.f32 %v1540, %v1546
        %v1679 = vmul.f32 %v1541, %v1547
        %v1680 = vld [vmem:[#allocation7] sm:$0xf]
        %v1682 = vperm.slane %v1680, 0
        %v1683 = vperm.slane %v1680, 1
        %v1684 = vperm.slane %v1680, 2
        %v1685 = vperm.slane %v1680, 3
        %v1690 = vadd.f32 %v1552, %v1682
        %v1691 = vadd.f32 %v1553, %v1683
        %v1692 = vadd.f32 %v1554, %v1684
        %v1693 = vadd.f32 %v1555, %v1685
        %v1694 = vadd.f32 %v1556, %v1682
        %v1695 = vadd.f32 %v1557, %v1683
        %v1696 = vadd.f32 %v1558, %v1684
        %v1697 = vadd.f32 %v1559, %v1685
        %v1698 = vadd.f32 %v1560, %v1682
        %v1699 = vadd.f32 %v1561, %v1683
        %v1700 = vadd.f32 %v1562, %v1684
        %v1701 = vadd.f32 %v1563, %v1685
        %v1702 = vadd.f32 %v1564, %v1682
        %v1703 = vadd.f32 %v1565, %v1683
        %v1704 = vadd.f32 %v1566, %v1684
        %v1705 = vadd.f32 %v1567, %v1685
        %v1706 = vadd.f32 %v1568, %v1682
        %v1707 = vadd.f32 %v1569, %v1683
        %v1708 = vadd.f32 %v1570, %v1684
        %v1709 = vadd.f32 %v1571, %v1685
        %v1710 = vadd.f32 %v1572, %v1682
        %v1711 = vadd.f32 %v1573, %v1683
        %v1712 = vadd.f32 %v1574, %v1684
        %v1713 = vadd.f32 %v1575, %v1685
        %v1714 = vadd.f32 %v1576, %v1682
        %v1715 = vadd.f32 %v1577, %v1683
        %v1716 = vadd.f32 %v1578, %v1684
        %v1717 = vadd.f32 %v1579, %v1685
        %v1718 = vadd.f32 %v1580, %v1682
        %v1719 = vadd.f32 %v1581, %v1683
        %v1720 = vadd.f32 %v1582, %v1684
        %v1721 = vadd.f32 %v1583, %v1685
        %v1722 = vadd.f32 %v1584, %v1682
        %v1723 = vadd.f32 %v1585, %v1683
        %v1724 = vadd.f32 %v1586, %v1684
        %v1725 = vadd.f32 %v1587, %v1685
        %v1726 = vadd.f32 %v1588, %v1682
        %v1727 = vadd.f32 %v1589, %v1683
        %v1728 = vadd.f32 %v1590, %v1684
        %v1729 = vadd.f32 %v1591, %v1685
        %v1730 = vadd.f32 %v1592, %v1682
        %v1731 = vadd.f32 %v1593, %v1683
        %v1732 = vadd.f32 %v1594, %v1684
        %v1733 = vadd.f32 %v1595, %v1685
        %v1734 = vadd.f32 %v1596, %v1682
        %v1735 = vadd.f32 %v1597, %v1683
        %v1736 = vadd.f32 %v1598, %v1684
        %v1737 = vadd.f32 %v1599, %v1685
        %v1738 = vadd.f32 %v1600, %v1682
        %v1739 = vadd.f32 %v1601, %v1683
        %v1740 = vadd.f32 %v1602, %v1684
        %v1741 = vadd.f32 %v1603, %v1685
        %v1742 = vadd.f32 %v1604, %v1682
        %v1743 = vadd.f32 %v1605, %v1683
        %v1744 = vadd.f32 %v1606, %v1684
        %v1745 = vadd.f32 %v1607, %v1685
        %v1746 = vadd.f32 %v1608, %v1682
        %v1747 = vadd.f32 %v1609, %v1683
        %v1748 = vadd.f32 %v1610, %v1684
        %v1749 = vadd.f32 %v1611, %v1685
        %v1750 = vadd.f32 %v1612, %v1682
        %v1751 = vadd.f32 %v1613, %v1683
        %v1752 = vadd.f32 %v1614, %v1684
        %v1753 = vadd.f32 %v1615, %v1685
        %v1754 = vadd.f32 %v1616, %v1682
        %v1755 = vadd.f32 %v1617, %v1683
        %v1756 = vadd.f32 %v1618, %v1684
        %v1757 = vadd.f32 %v1619, %v1685
        %v1758 = vadd.f32 %v1620, %v1682
        %v1759 = vadd.f32 %v1621, %v1683
        %v1760 = vadd.f32 %v1622, %v1684
        %v1761 = vadd.f32 %v1623, %v1685
        %v1762 = vadd.f32 %v1624, %v1682
        %v1763 = vadd.f32 %v1625, %v1683
        %v1764 = vadd.f32 %v1626, %v1684
        %v1765 = vadd.f32 %v1627, %v1685
        %v1766 = vadd.f32 %v1628, %v1682
        %v1767 = vadd.f32 %v1629, %v1683
        %v1768 = vadd.f32 %v1630, %v1684
        %v1769 = vadd.f32 %v1631, %v1685
        %v1770 = vadd.f32 %v1632, %v1682
        %v1771 = vadd.f32 %v1633, %v1683
        %v1772 = vadd.f32 %v1634, %v1684
        %v1773 = vadd.f32 %v1635, %v1685
        %v1774 = vadd.f32 %v1636, %v1682
        %v1775 = vadd.f32 %v1637, %v1683
        %v1776 = vadd.f32 %v1638, %v1684
        %v1777 = vadd.f32 %v1639, %v1685
        %v1778 = vadd.f32 %v1640, %v1682
        %v1779 = vadd.f32 %v1641, %v1683
        %v1780 = vadd.f32 %v1642, %v1684
        %v1781 = vadd.f32 %v1643, %v1685
        %v1782 = vadd.f32 %v1644, %v1682
        %v1783 = vadd.f32 %v1645, %v1683
        %v1784 = vadd.f32 %v1646, %v1684
        %v1785 = vadd.f32 %v1647, %v1685
        %v1786 = vadd.f32 %v1648, %v1682
        %v1787 = vadd.f32 %v1649, %v1683
        %v1788 = vadd.f32 %v1650, %v1684
        %v1789 = vadd.f32 %v1651, %v1685
        %v1790 = vadd.f32 %v1652, %v1682
        %v1791 = vadd.f32 %v1653, %v1683
        %v1792 = vadd.f32 %v1654, %v1684
        %v1793 = vadd.f32 %v1655, %v1685
        %v1794 = vadd.f32 %v1656, %v1682
        %v1795 = vadd.f32 %v1657, %v1683
        %v1796 = vadd.f32 %v1658, %v1684
        %v1797 = vadd.f32 %v1659, %v1685
        %v1798 = vadd.f32 %v1660, %v1682
        %v1799 = vadd.f32 %v1661, %v1683
        %v1800 = vadd.f32 %v1662, %v1684
        %v1801 = vadd.f32 %v1663, %v1685
        %v1802 = vadd.f32 %v1664, %v1682
        %v1803 = vadd.f32 %v1665, %v1683
        %v1804 = vadd.f32 %v1666, %v1684
        %v1805 = vadd.f32 %v1667, %v1685
        %v1806 = vadd.f32 %v1668, %v1682
        %v1807 = vadd.f32 %v1669, %v1683
        %v1808 = vadd.f32 %v1670, %v1684
        %v1809 = vadd.f32 %v1671, %v1685
        %v1810 = vadd.f32 %v1672, %v1682
        %v1811 = vadd.f32 %v1673, %v1683
        %v1812 = vadd.f32 %v1674, %v1684
        %v1813 = vadd.f32 %v1675, %v1685
        %v1814 = vadd.f32 %v1676, %v1682
        %v1815 = vadd.f32 %v1677, %v1683
        %v1816 = vadd.f32 %v1678, %v1684
        %v1817 = vadd.f32 %v1679, %v1685
        %v1818 = vpack.c.bf16 %v1691, %v1690
        %v1819 = vpack.c.bf16 %v1693, %v1692
        %v1820 = vpack.c.bf16 %v1695, %v1694
        %v1821 = vpack.c.bf16 %v1697, %v1696
        %v1822 = vpack.c.bf16 %v1699, %v1698
        %v1823 = vpack.c.bf16 %v1701, %v1700
        %v1824 = vpack.c.bf16 %v1703, %v1702
        %v1825 = vpack.c.bf16 %v1705, %v1704
        %v1826 = vpack.c.bf16 %v1707, %v1706
        %v1827 = vpack.c.bf16 %v1709, %v1708
        %v1828 = vpack.c.bf16 %v1711, %v1710
        %v1829 = vpack.c.bf16 %v1713, %v1712
        %v1830 = vpack.c.bf16 %v1715, %v1714
        %v1831 = vpack.c.bf16 %v1717, %v1716
        %v1832 = vpack.c.bf16 %v1719, %v1718
        %v1833 = vpack.c.bf16 %v1721, %v1720
        %v1834 = vpack.c.bf16 %v1723, %v1722
        %v1835 = vpack.c.bf16 %v1725, %v1724
        %v1836 = vpack.c.bf16 %v1727, %v1726
        %v1837 = vpack.c.bf16 %v1729, %v1728
        %v1838 = vpack.c.bf16 %v1731, %v1730
        %v1839 = vpack.c.bf16 %v1733, %v1732
        %v1840 = vpack.c.bf16 %v1735, %v1734
        %v1841 = vpack.c.bf16 %v1737, %v1736
        %v1842 = vpack.c.bf16 %v1739, %v1738
        %v1843 = vpack.c.bf16 %v1741, %v1740
        %v1844 = vpack.c.bf16 %v1743, %v1742
        %v1845 = vpack.c.bf16 %v1745, %v1744
        %v1846 = vpack.c.bf16 %v1747, %v1746
        %v1847 = vpack.c.bf16 %v1749, %v1748
        %v1848 = vpack.c.bf16 %v1751, %v1750
        %v1849 = vpack.c.bf16 %v1753, %v1752
        %v1850 = vpack.c.bf16 %v1755, %v1754
        %v1851 = vpack.c.bf16 %v1757, %v1756
        %v1852 = vpack.c.bf16 %v1759, %v1758
        %v1853 = vpack.c.bf16 %v1761, %v1760
        %v1854 = vpack.c.bf16 %v1763, %v1762
        %v1855 = vpack.c.bf16 %v1765, %v1764
        %v1856 = vpack.c.bf16 %v1767, %v1766
        %v1857 = vpack.c.bf16 %v1769, %v1768
        %v1858 = vpack.c.bf16 %v1771, %v1770
        %v1859 = vpack.c.bf16 %v1773, %v1772
        %v1860 = vpack.c.bf16 %v1775, %v1774
        %v1861 = vpack.c.bf16 %v1777, %v1776
        %v1862 = vpack.c.bf16 %v1779, %v1778
        %v1863 = vpack.c.bf16 %v1781, %v1780
        %v1864 = vpack.c.bf16 %v1783, %v1782
        %v1865 = vpack.c.bf16 %v1785, %v1784
        %v1866 = vpack.c.bf16 %v1787, %v1786
        %v1867 = vpack.c.bf16 %v1789, %v1788
        %v1868 = vpack.c.bf16 %v1791, %v1790
        %v1869 = vpack.c.bf16 %v1793, %v1792
        %v1870 = vpack.c.bf16 %v1795, %v1794
        %v1871 = vpack.c.bf16 %v1797, %v1796
        %v1872 = vpack.c.bf16 %v1799, %v1798
        %v1873 = vpack.c.bf16 %v1801, %v1800
        %v1874 = vpack.c.bf16 %v1803, %v1802
        %v1875 = vpack.c.bf16 %v1805, %v1804
        %v1876 = vpack.c.bf16 %v1807, %v1806
        %v1877 = vpack.c.bf16 %v1809, %v1808
        %v1878 = vpack.c.bf16 %v1811, %v1810
        %v1879 = vpack.c.bf16 %v1813, %v1812
        %v1880 = vpack.c.bf16 %v1815, %v1814
        %v1881 = vpack.c.bf16 %v1817, %v1816
        %1882 = vst [vmem:[%s220] sm:$0xff] %v1818
        %1883 = vst [vmem:[%s220 + $0x8] sm:$0xff] %v1819
        %1884 = vst [vmem:[%s220 + $0x10] sm:$0xff] %v1820
        %1885 = vst [vmem:[%s220 + $0x18] sm:$0xff] %v1821
        %1886 = vst [vmem:[%s220 + $0x20] sm:$0xff] %v1822
        %1887 = vst [vmem:[%s220 + $0x28] sm:$0xff] %v1823
        %1888 = vst [vmem:[%s220 + $0x30] sm:$0xff] %v1824
        %1889 = vst [vmem:[%s220 + $0x38] sm:$0xff] %v1825
        %1890 = vst [vmem:[%s220 + $0x40] sm:$0xff] %v1826
        %1891 = vst [vmem:[%s220 + $0x48] sm:$0xff] %v1827
        %1892 = vst [vmem:[%s220 + $0x50] sm:$0xff] %v1828
        %1893 = vst [vmem:[%s220 + $0x58] sm:$0xff] %v1829
        %1894 = vst [vmem:[%s220 + $0x60] sm:$0xff] %v1830
        %1895 = vst [vmem:[%s220 + $0x68] sm:$0xff] %v1831
        %1896 = vst [vmem:[%s220 + $0x70] sm:$0xff] %v1832
        %1897 = vst [vmem:[%s220 + $0x78] sm:$0xff] %v1833
        %1898 = vst [vmem:[%s220 + $0x80] sm:$0xff] %v1834
        %1899 = vst [vmem:[%s220 + $0x88] sm:$0xff] %v1835
        %1900 = vst [vmem:[%s220 + $0x90] sm:$0xff] %v1836
        %1901 = vst [vmem:[%s220 + $0x98] sm:$0xff] %v1837
        %1902 = vst [vmem:[%s220 + $0xa0] sm:$0xff] %v1838
        %1903 = vst [vmem:[%s220 + $0xa8] sm:$0xff] %v1839
        %1904 = vst [vmem:[%s220 + $0xb0] sm:$0xff] %v1840
        %1905 = vst [vmem:[%s220 + $0xb8] sm:$0xff] %v1841
        %1906 = vst [vmem:[%s220 + $0xc0] sm:$0xff] %v1842
        %1907 = vst [vmem:[%s220 + $0xc8] sm:$0xff] %v1843
        %1908 = vst [vmem:[%s220 + $0xd0] sm:$0xff] %v1844
        %1909 = vst [vmem:[%s220 + $0xd8] sm:$0xff] %v1845
        %1910 = vst [vmem:[%s220 + $0xe0] sm:$0xff] %v1846
        %1911 = vst [vmem:[%s220 + $0xe8] sm:$0xff] %v1847
        %1912 = vst [vmem:[%s220 + $0xf0] sm:$0xff] %v1848
        %1913 = vst [vmem:[%s220 + $0xf8] sm:$0xff] %v1849
        %1914 = vst [vmem:[%s220 + $0x100] sm:$0xff] %v1850
        %1915 = vst [vmem:[%s220 + $0x108] sm:$0xff] %v1851
        %1916 = vst [vmem:[%s220 + $0x110] sm:$0xff] %v1852
        %1917 = vst [vmem:[%s220 + $0x118] sm:$0xff] %v1853
        %1918 = vst [vmem:[%s220 + $0x120] sm:$0xff] %v1854
        %1919 = vst [vmem:[%s220 + $0x128] sm:$0xff] %v1855
        %1920 = vst [vmem:[%s220 + $0x130] sm:$0xff] %v1856
        %1921 = vst [vmem:[%s220 + $0x138] sm:$0xff] %v1857
        %1922 = vst [vmem:[%s220 + $0x140] sm:$0xff] %v1858
        %1923 = vst [vmem:[%s220 + $0x148] sm:$0xff] %v1859
        %1924 = vst [vmem:[%s220 + $0x150] sm:$0xff] %v1860
        %1925 = vst [vmem:[%s220 + $0x158] sm:$0xff] %v1861
        %1926 = vst [vmem:[%s220 + $0x160] sm:$0xff] %v1862
        %1927 = vst [vmem:[%s220 + $0x168] sm:$0xff] %v1863
        %1928 = vst [vmem:[%s220 + $0x170] sm:$0xff] %v1864
        %1929 = vst [vmem:[%s220 + $0x178] sm:$0xff] %v1865
        %1930 = vst [vmem:[%s220 + $0x180] sm:$0xff] %v1866
        %1931 = vst [vmem:[%s220 + $0x188] sm:$0xff] %v1867
        %1932 = vst [vmem:[%s220 + $0x190] sm:$0xff] %v1868
        %1933 = vst [vmem:[%s220 + $0x198] sm:$0xff] %v1869
        %1934 = vst [vmem:[%s220 + $0x1a0] sm:$0xff] %v1870
        %1935 = vst [vmem:[%s220 + $0x1a8] sm:$0xff] %v1871
        %1936 = vst [vmem:[%s220 + $0x1b0] sm:$0xff] %v1872
        %1937 = vst [vmem:[%s220 + $0x1b8] sm:$0xff] %v1873
        %1938 = vst [vmem:[%s220 + $0x1c0] sm:$0xff] %v1874
        %1939 = vst [vmem:[%s220 + $0x1c8] sm:$0xff] %v1875
        %1940 = vst [vmem:[%s220 + $0x1d0] sm:$0xff] %v1876
        %1941 = vst [vmem:[%s220 + $0x1d8] sm:$0xff] %v1877
        %1942 = vst [vmem:[%s220 + $0x1e0] sm:$0xff] %v1878
        %1943 = vst [vmem:[%s220 + $0x1e8] sm:$0xff] %v1879
        %1944 = vst [vmem:[%s220 + $0x1f0] sm:$0xff] %v1880
        %1945 = vst [vmem:[%s220 + $0x1f8] sm:$0xff] %v1881
        %s1946 = sand.u32 %s97, 1
        %s1947 = scalar_lea.sflag [#allocation4], %s1946
        %s1948 = sand.u32 %s97, 1
        %s1949 = smul.addr %s1948, 512
        %s1950 = scalar_lea.vmem [#allocation8], %s1949
        // Predicated region
        $region45: #{tpu_custom_call.1} parent=31 // pred_check
          %p1951 = pneg %p107
        $region46: #{tpu_custom_call.1} parent=31 // pred_check_branch
          %1953 = sbr.rel (%p1951) target = $region48
        $region47: #{tpu_custom_call.1} parent=31 // pred_region
          %s1954 = smul.u32 32, %s21
          %1956 = vsyncadd %s1947, 0
          %s1957 = smul.addr %s1954, 4
          %s1958 = smul.addr %s1957, 4
          %s1959 = scalar_lea.hbm %s3, %s1958
          %s1960 = sshll.u32 %s1950, 4
          %s1961 = int_to_ptr.vmem [resolvable:$true] %s1960
          %s1962 = sshll.u32 %s1959, 4
          %s1963 = int_to_ptr.hbm [resolvable:$true] %s1962
          %1968 = dma.vmem_to_hbm [thread:$0]  %s1961, 8192, %s1963, %s1947, 256, 256, 16
        $region48: #{tpu_custom_call.1} parent=31 // pred_fallthru
          _
      $region32: #{tpu_custom_call.1} parent=5 // pred_fallthru
        _
      %p1969 = scmp.le.s32.totalorder 2, %s16
      // Predicated region
      $region49: #{tpu_custom_call.1} parent=5 // pred_check
        %p1970 = pneg %p1969
      $region50: #{tpu_custom_call.1} parent=5 // pred_check_branch
        %1972 = sbr.rel (%p1970) target = $region52
      $region51: #{tpu_custom_call.1} parent=5 // pred_region
        %s1973 = ssub.s32 %s16, 2
        // Predicated region
        $region53: #{tpu_custom_call.1} parent=51 // pred_check
          %p1974 = pneg %p113
        $region54: #{tpu_custom_call.1} parent=51 // pred_check_branch
          %1976 = sbr.rel (%p1974) target = $region56
        $region55: #{tpu_custom_call.1} parent=51 // pred_region
          %s1977 = sand.u32 %s98, 1
          %s1978 = scalar_lea.sflag [#allocation4], %s1977
          %s1979 = sand.u32 %s98, 1
          %s1980 = smul.addr %s1979, 512
          %s1981 = scalar_lea.vmem [#allocation8], %s1980
          %1983 = dma.done %s1978, 8192
        $region56: #{tpu_custom_call.1} parent=51 // pred_fallthru
          _
      $region52: #{tpu_custom_call.1} parent=5 // pred_fallthru
        _
    $region6: #{tpu_custom_call.1} parent=1 // loop_footer
      %s20 = sadd.s32 1, %s16
    $region7: #{tpu_custom_call.1} parent=1 // loop_footer_branch
      %15 = sbr.rel target = $region3
    $region8: #{tpu_custom_call.1} parent=1 // loop_exit
      _
    %1984 = vsyncpa [#allocation3], 1
    %s1985 = scalar_lea.sflag [#allocation3], 1
    %1986 = vsyncpa %s1985, 1
    %1987 = vsyncpa [#allocation6], 1
    %1988 = vsyncpa [#allocation4], 1
    %s1989 = scalar_lea.sflag [#allocation4], 1
    %1990 = vsyncpa %s1989, 1

</llo_original>
